<compile_context>
chip_gen: v7x
topology: tpu7x:2x2x1
jax: 0.10.0
libtpu: 0.0.40
codegen_flags: <defaults>
</compile_context>

<pallas_src>
import functools
import math

import jax
import jax.numpy as jnp
from jax.experimental import pallas as pl
from jax.experimental.pallas import tpu as pltpu

FEATURE_NUM = 11
HIDDEN = 2 * FEATURE_NUM                  # 22
CONV_OUT = FEATURE_NUM + 2 * 1 - 3 + 1    # 11
MID = math.ceil(FEATURE_NUM / 2)          # 6
BN_EPS = 1e-5

GP = 32        # per-gate sublane padding (>= 22, multiple of 8 -> aligned slices)
HP = 32        # padded hidden width
L1P = 16       # padded linear1 out (>= 11)
L2P = 8        # padded linear2 out (>= 6)
L3P = 8        # padded linear3 out (>= 2)
TILE_N = 1024  # batch tile on the lane axis (per-step VMEM ~1-2 MB, fits all gens)


# ----------------------------- kernels -------------------------------------


def lstm_stage_kernel(x_ref, w1_ref, b1_ref, w2_ref, b2_ref,
                      h2_ref, sum_ref, sq_ref, *, n_real):
    """Conv (folded) + 2 LSTM cells; emits h2 tile + masked BN partial sums."""
    i = pl.program_id(0)
    x = x_ref[...].astype(jnp.bfloat16)                       # (11, T)

    # LSTM layer 1: single packed gate matmul (conv already folded into w1/b1).
    z1 = jnp.dot(w1_ref[...], x, preferred_element_type=jnp.float32) + b1_ref[...]
    i1 = jax.nn.sigmoid(z1[0 * GP:1 * GP, :])
    g1 = jnp.tanh(z1[1 * GP:2 * GP, :])
    o1 = jax.nn.sigmoid(z1[2 * GP:3 * GP, :])
    h1 = o1 * jnp.tanh(i1 * g1)                               # (32, T); rows 22: == 0

    # LSTM layer 2.
    z2 = jnp.dot(w2_ref[...], h1.astype(jnp.bfloat16),
                 preferred_element_type=jnp.float32) + b2_ref[...]
    i2 = jax.nn.sigmoid(z2[0 * GP:1 * GP, :])
    g2 = jnp.tanh(z2[1 * GP:2 * GP, :])
    o2 = jax.nn.sigmoid(z2[2 * GP:3 * GP, :])
    h2 = o2 * jnp.tanh(i2 * g2)                               # (32, T); rows 22: == 0

    h2_ref[...] = h2

    # BatchNorm partial statistics: mask out the lanes that pad the batch.
    lane = jax.lax.broadcasted_iota(jnp.int32, h2.shape, 1)
    valid = (i * TILE_N + lane) < n_real
    hm = jnp.where(valid, h2, 0.0)
    sum_ref[...] = jnp.sum(hm, axis=1, keepdims=True)[None]        # (1, 32, 1)
    sq_ref[...] = jnp.sum(hm * hm, axis=1, keepdims=True)[None]    # (1, 32, 1)


def head_kernel(h2_ref, scale_ref, shift_ref,
                wl1_ref, bl1_ref, wl2_ref, bl2_ref, wl3_ref, bl3_ref, o_ref):
    """BatchNorm affine (precomputed scale/shift) + Linear/ReLU x2 + Linear."""
    xn = h2_ref[...] * scale_ref[...] + shift_ref[...]              # (32, T) f32
    y = jnp.dot(wl1_ref[...], xn.astype(jnp.bfloat16),
                preferred_element_type=jnp.float32) + bl1_ref[...]
    y = jnp.maximum(y, 0.0)
    y = jnp.dot(wl2_ref[...], y.astype(jnp.bfloat16),
                preferred_element_type=jnp.float32) + bl2_ref[...]
    y = jnp.maximum(y, 0.0)
    y = jnp.dot(wl3_ref[...], y.astype(jnp.bfloat16),
                preferred_element_type=jnp.float32) + bl3_ref[...]
    o_ref[...] = y                                                  # (8, T); rows 0:2 real


# ------------------------- glue: weight packing -----------------------------


def pack_params(lp):
    """Fold the conv into LSTM-1, pack gates, pad everything, cast weights to bf16."""
    f32 = jnp.float32
    cw = lp["conv_w"].astype(f32)
    cb = lp["conv_b"].astype(f32)[0]
    # xc (features-first) = band @ x + conv_b ; band[j, j-1]=w0, [j,j]=w1, [j,j+1]=w2
    band = (jnp.eye(FEATURE_NUM, k=-1, dtype=f32) * cw[0]
            + jnp.eye(FEATURE_NUM, k=0, dtype=f32) * cw[1]
            + jnp.eye(FEATURE_NUM, k=1, dtype=f32) * cw[2])

    def pack_gates(ws, bs, in_real, in_pad, fold_conv):
        wp = jnp.zeros((3 * GP, in_pad), f32)
        bp = jnp.zeros((3 * GP, 1), f32)
        for k, (wg, bg) in enumerate(zip(ws, bs)):
            wg = wg.astype(f32)
            bg = bg.astype(f32)
            if fold_conv:                       # W@(band@x + cb) + b = (W@band)@x + (cb*rowsum(W) + b)
                bg = bg + cb * jnp.sum(wg, axis=1)
                wg = wg @ band
            wp = wp.at[k * GP:k * GP + HIDDEN, :in_real].set(wg)
            bp = bp.at[k * GP:k * GP + HIDDEN, 0].set(bg)
        return wp.astype(jnp.bfloat16), bp

    w1, b1 = pack_gates([lp["wi1"], lp["wg1"], lp["wo1"]],
                        [lp["bi1"], lp["bg1"], lp["bo1"]],
                        CONV_OUT, CONV_OUT, True)
    w2, b2 = pack_gates([lp["wi2"], lp["wg2"], lp["wo2"]],
                        [lp["bi2"], lp["bg2"], lp["bo2"]],
                        HIDDEN, HP, False)

    def pack_linear(wg, bg, out_pad, in_pad):
        o_r, i_r = wg.shape
        wp = jnp.zeros((out_pad, in_pad), f32).at[:o_r, :i_r].set(wg.astype(f32))
        bp = jnp.zeros((out_pad, 1), f32).at[:o_r, 0].set(bg.astype(f32))
        return wp.astype(jnp.bfloat16), bp

    wl1, bl1 = pack_linear(lp["l1_w"], lp["l1_b"], L1P, HP)
    wl2, bl2 = pack_linear(lp["l2_w"], lp["l2_b"], L2P, L1P)
    wl3, bl3 = pack_linear(lp["l3_w"], lp["l3_b"], L3P, L2P)

    gamma = jnp.zeros((HP, 1), f32).at[:HIDDEN, 0].set(lp["gamma"].astype(f32))
    beta = jnp.zeros((HP, 1), f32).at[:HIDDEN, 0].set(lp["beta"].astype(f32))

    return dict(w1=w1, b1=b1, w2=w2, b2=b2,
                wl1=wl1, bl1=bl1, wl2=wl2, bl2=bl2, wl3=wl3, bl3=bl3,
                gamma=gamma, beta=beta)


# ------------------------------ forward -------------------------------------


def lstm_rnn_forward(x, pk):
    x2 = x.reshape(-1, FEATURE_NUM).astype(jnp.float32)     # mirrors x.view(-1, 1, 11)
    n = x2.shape[0]
    n_tiles = pl.cdiv(n, TILE_N)
    npad = n_tiles * TILE_N
    # Batch on the lane axis: (features, padded_batch).
    xt = jnp.zeros((FEATURE_NUM, npad), jnp.float32).at[:, :n].set(x2.T)

    def full_spec(a):
        nd = a.ndim
        return pl.BlockSpec(a.shape, lambda i, _nd=nd: (0,) * _nd)

    # ---- pass 1: conv+LSTM, per-tile BN partial stats ----
    h2, psum, psq = pl.pallas_call(
        functools.partial(lstm_stage_kernel, n_real=n),
        grid=(n_tiles,),
        in_specs=[
            pl.BlockSpec((FEATURE_NUM, TILE_N), lambda i: (0, i)),
            full_spec(pk["w1"]), full_spec(pk["b1"]),
            full_spec(pk["w2"]), full_spec(pk["b2"]),
        ],
        out_specs=[
            pl.BlockSpec((HP, TILE_N), lambda i: (0, i)),
            pl.BlockSpec((1, HP, 1), lambda i: (i, 0, 0)),
            pl.BlockSpec((1, HP, 1), lambda i: (i, 0, 0)),
        ],
        out_shape=[
            jax.ShapeDtypeStruct((HP, npad), jnp.float32),
            jax.ShapeDtypeStruct((n_tiles, HP, 1), jnp.float32),
            jax.ShapeDtypeStruct((n_tiles, HP, 1), jnp.float32),
        ],
        compiler_params=pltpu.CompilerParams(dimension_semantics=("parallel",)),
    )(xt, pk["w1"], pk["b1"], pk["w2"], pk["b2"])

    # ---- global BatchNorm statistics (training mode: batch mean, biased var) ----
    ssum = jnp.sum(psum, axis=0)                            # (HP, 1)
    ssq = jnp.sum(psq, axis=0)                              # (HP, 1)
    mean = ssum / n
    var = jnp.maximum(ssq / n - mean * mean, 0.0)
    inv = jax.lax.rsqrt(var + BN_EPS)
    scale = pk["gamma"] * inv                               # padded rows -> 0
    shift = pk["beta"] - mean * scale

    # ---- pass 2: BN affine + MLP head ----
    out = pl.pallas_call(
        head_kernel,
        grid=(n_tiles,),
        in_specs=[
            pl.BlockSpec((HP, TILE_N), lambda i: (0, i)),
            full_spec(scale), full_spec(shift),
            full_spec(pk["wl1"]), full_spec(pk["bl1"]),
            full_spec(pk["wl2"]), full_spec(pk["bl2"]),
            full_spec(pk["wl3"]), full_spec(pk["bl3"]),
        ],
        out_specs=pl.BlockSpec((L3P, TILE_N), lambda i: (0, i)),
        out_shape=jax.ShapeDtypeStruct((L3P, npad), jnp.float32),
        compiler_params=pltpu.CompilerParams(dimension_semantics=("parallel",)),
    )(h2, scale, shift, pk["wl1"], pk["bl1"], pk["wl2"], pk["bl2"],
      pk["wl3"], pk["bl3"])

    return out[:2, :n].T                                    # (N, 2)


# --------------------------- params & reference -----------------------------


def init_params(key):
    keys = iter(jax.random.split(key, 48))

    def u(shape, bound):
        return jax.random.uniform(next(keys), shape, jnp.float32, -bound, bound)

    p = {}
    cb = 1.0 / math.sqrt(1 * 3)
    p["conv_w"] = u((3,), cb)
    p["conv_b"] = u((1,), cb)

    hb = 1.0 / math.sqrt(HIDDEN)
    # Per-gate PyTorch-layout (out, in) weights; combined bias = b_ih + b_hh.
    # Forget gate is omitted (seq_len == 1, c0 == 0 -> it cannot affect the output).
    for g in ("i", "g", "o"):
        p[f"w{g}1"] = u((HIDDEN, CONV_OUT), hb)
        p[f"b{g}1"] = u((HIDDEN,), hb) + u((HIDDEN,), hb)
        p[f"w{g}2"] = u((HIDDEN, HIDDEN), hb)
        p[f"b{g}2"] = u((HIDDEN,), hb) + u((HIDDEN,), hb)

    p["gamma"] = jnp.ones((HIDDEN,), jnp.float32)
    p["beta"] = jnp.zeros((HIDDEN,), jnp.float32)

    b1 = 1.0 / math.sqrt(HIDDEN)
    p["l1_w"] = u((FEATURE_NUM, HIDDEN), b1)
    p["l1_b"] = u((FEATURE_NUM,), b1)
    b2 = 1.0 / math.sqrt(FEATURE_NUM)
    p["l2_w"] = u((MID, FEATURE_NUM), b2)
    p["l2_b"] = u((MID,), b2)
    b3 = 1.0 / math.sqrt(MID)
    p["l3_w"] = u((2, MID), b3)
    p["l3_b"] = u((2,), b3)
    return p


def reference_forward(x, lp):
    # Pure-JAX f32 reference on the UNFOLDED logical params.
    x2 = x.reshape(-1, FEATURE_NUM).astype(jnp.float32)
    xp = jnp.pad(x2, ((0, 0), (1, 1)))
    w = lp["conv_w"]
    xc = w[0] * xp[:, :-2] + w[1] * xp[:, 1:-1] + w[2] * xp[:, 2:] + lp["conv_b"][0]

    def cell(inp, wi, wg, wo, bi, bg, bo):
        i = jax.nn.sigmoid(inp @ wi.T + bi)
        g = jnp.tanh(inp @ wg.T + bg)
        o = jax.nn.sigmoid(inp @ wo.T + bo)
        return o * jnp.tanh(i * g)

    h1 = cell(xc, lp["wi1"], lp["wg1"], lp["wo1"], lp["bi1"], lp["bg1"], lp["bo1"])
    h2 = cell(h1, lp["wi2"], lp["wg2"], lp["wo2"], lp["bi2"], lp["bg2"], lp["bo2"])
    mean = jnp.mean(h2, axis=0, keepdims=True)
    var = jnp.mean((h2 - mean) ** 2, axis=0, keepdims=True)
    xn = (h2 - mean) / jnp.sqrt(var + BN_EPS) * lp["gamma"] + lp["beta"]
    y = jnp.maximum(xn @ lp["l1_w"].T + lp["l1_b"], 0.0)
    y = jnp.maximum(y @ lp["l2_w"].T + lp["l2_b"], 0.0)
    return y @ lp["l3_w"].T + lp["l3_b"]


if __name__ == "__main__":
    key = jax.random.PRNGKey(0)
    kx, kp = jax.random.split(key)
    x = jax.random.normal(kx, (8, FEATURE_NUM), jnp.float32)   # batch=8, feature_num=11
    logical = init_params(kp)
    packed = pack_params(logical)

    out = jax.block_until_ready(lstm_rnn_forward(x, packed))
    ref = reference_forward(x, logical)

    assert out.shape == (8, 2), out.shape
    assert bool(jnp.all(jnp.isfinite(out)))
    err = float(jnp.max(jnp.abs(out - ref)))
    assert bool(jnp.allclose(out, ref, rtol=2e-2, atol=2e-2)), err
    print("KERNEL_OK")
</pallas_src>

<mosaic_0001>
module attributes {stable_mosaic.version = 11 : i64} {
  func.func @lstm_stage_kernel(%arg0: i32, %arg1: memref<11x1024xf32, #tpu.memory_space<vmem>>, %arg2: memref<96x11xbf16, #tpu.memory_space<vmem>>, %arg3: memref<96x1xf32, #tpu.memory_space<vmem>>, %arg4: memref<96x32xbf16, #tpu.memory_space<vmem>>, %arg5: memref<96x1xf32, #tpu.memory_space<vmem>>, %arg6: memref<32x1024xf32, #tpu.memory_space<vmem>>, %arg7: memref<1x32x1xf32, #tpu.memory_space<vmem>>, %arg8: memref<1x32x1xf32, #tpu.memory_space<vmem>>) attributes {dimension_semantics = [#tpu.dimension_semantics<parallel>], iteration_bounds = array<i64: 1>, scalar_prefetch = 0 : i64, scratch_operands = 0 : i64, tpu.core_type = #tpu.core_type<tc>, window_params = [{transform_indices = @transform_0, window_bounds = array<i64: 11, 1024>}, {pipeline_mode = #tpu.pipeline_mode<synchronous>, transform_indices = @transform_1, window_bounds = array<i64: 96, 11>}, {pipeline_mode = #tpu.pipeline_mode<synchronous>, transform_indices = @transform_2, window_bounds = array<i64: 96, 1>}, {pipeline_mode = #tpu.pipeline_mode<synchronous>, transform_indices = @transform_3, window_bounds = array<i64: 96, 32>}, {pipeline_mode = #tpu.pipeline_mode<synchronous>, transform_indices = @transform_4, window_bounds = array<i64: 96, 1>}, {transform_indices = @transform_5, window_bounds = array<i64: 32, 1024>}, {transform_indices = @transform_6, window_bounds = array<i64: 1, 32, 1>}, {transform_indices = @transform_7, window_bounds = array<i64: 1, 32, 1>}]} {
    %c0 = arith.constant 0 : index
    %c0_0 = arith.constant 0 : index
    %0 = vector.load %arg1[%c0, %c0_0] : memref<11x1024xf32, #tpu.memory_space<vmem>>, vector<11x1024xf32>
    %1 = arith.truncf %0 : vector<11x1024xf32> to vector<11x1024xbf16>
    %c0_1 = arith.constant 0 : index
    %c0_2 = arith.constant 0 : index
    %2 = vector.load %arg2[%c0_1, %c0_2] : memref<96x11xbf16, #tpu.memory_space<vmem>>, vector<96x11xbf16>
    %cst = arith.constant dense<0.000000e+00> : vector<96x1024xf32>
    %3 = tpu.matmul %2, %1, %cst {dimension_numbers = #tpu.dot_dimension_numbers<[1], [0], [0], [1], [0, 0, 1, 1], [], []>} : vector<96x11xbf16>, vector<11x1024xbf16>, vector<96x1024xf32> -> vector<96x1024xf32>
    %c0_3 = arith.constant 0 : index
    %c0_4 = arith.constant 0 : index
    %4 = vector.load %arg3[%c0_3, %c0_4] : memref<96x1xf32, #tpu.memory_space<vmem>>, vector<96x1xf32>
    %5 = vector.broadcast %4 : vector<96x1xf32> to vector<96x1024xf32>
    %6 = arith.addf %3, %5 : vector<96x1024xf32>
    %7 = vector.extract_strided_slice %6 {offsets = [0, 0], sizes = [32, 1024], strides = [1, 1]} : vector<96x1024xf32> to vector<32x1024xf32>
    %8 = arith.negf %7 : vector<32x1024xf32>
    %9 = math.exp %8 : vector<32x1024xf32>
    %cst_5 = arith.constant 1.000000e+00 : f32
    %10 = vector.broadcast %cst_5 : f32 to vector<32x1024xf32>
    %11 = arith.addf %10, %9 : vector<32x1024xf32>
    %12 = arith.divf %10, %11 : vector<32x1024xf32>
    %13 = vector.extract_strided_slice %6 {offsets = [32, 0], sizes = [32, 1024], strides = [1, 1]} : vector<96x1024xf32> to vector<32x1024xf32>
    %14 = math.tanh %13 : vector<32x1024xf32>
    %15 = vector.extract_strided_slice %6 {offsets = [64, 0], sizes = [32, 1024], strides = [1, 1]} : vector<96x1024xf32> to vector<32x1024xf32>
    %16 = arith.negf %15 : vector<32x1024xf32>
    %17 = math.exp %16 : vector<32x1024xf32>
    %cst_6 = arith.constant 1.000000e+00 : f32
    %18 = vector.broadcast %cst_6 : f32 to vector<32x1024xf32>
    %19 = arith.addf %18, %17 : vector<32x1024xf32>
    %20 = arith.divf %18, %19 : vector<32x1024xf32>
    %21 = arith.mulf %12, %14 : vector<32x1024xf32>
    %22 = math.tanh %21 : vector<32x1024xf32>
    %23 = arith.mulf %20, %22 : vector<32x1024xf32>
    %c0_7 = arith.constant 0 : index
    %c0_8 = arith.constant 0 : index
    %24 = vector.load %arg4[%c0_7, %c0_8] : memref<96x32xbf16, #tpu.memory_space<vmem>>, vector<96x32xbf16>
    %25 = arith.truncf %23 : vector<32x1024xf32> to vector<32x1024xbf16>
    %cst_9 = arith.constant dense<0.000000e+00> : vector<96x1024xf32>
    %26 = tpu.matmul %24, %25, %cst_9 {dimension_numbers = #tpu.dot_dimension_numbers<[1], [0], [0], [1], [0, 0, 1, 1], [], []>} : vector<96x32xbf16>, vector<32x1024xbf16>, vector<96x1024xf32> -> vector<96x1024xf32>
    %c0_10 = arith.constant 0 : index
    %c0_11 = arith.constant 0 : index
    %27 = vector.load %arg5[%c0_10, %c0_11] : memref<96x1xf32, #tpu.memory_space<vmem>>, vector<96x1xf32>
    %28 = vector.broadcast %27 : vector<96x1xf32> to vector<96x1024xf32>
    %29 = arith.addf %26, %28 : vector<96x1024xf32>
    %30 = vector.extract_strided_slice %29 {offsets = [0, 0], sizes = [32, 1024], strides = [1, 1]} : vector<96x1024xf32> to vector<32x1024xf32>
    %31 = arith.negf %30 : vector<32x1024xf32>
    %32 = math.exp %31 : vector<32x1024xf32>
    %cst_12 = arith.constant 1.000000e+00 : f32
    %33 = vector.broadcast %cst_12 : f32 to vector<32x1024xf32>
    %34 = arith.addf %33, %32 : vector<32x1024xf32>
    %35 = arith.divf %33, %34 : vector<32x1024xf32>
    %36 = vector.extract_strided_slice %29 {offsets = [32, 0], sizes = [32, 1024], strides = [1, 1]} : vector<96x1024xf32> to vector<32x1024xf32>
    %37 = math.tanh %36 : vector<32x1024xf32>
    %38 = vector.extract_strided_slice %29 {offsets = [64, 0], sizes = [32, 1024], strides = [1, 1]} : vector<96x1024xf32> to vector<32x1024xf32>
    %39 = arith.negf %38 : vector<32x1024xf32>
    %40 = math.exp %39 : vector<32x1024xf32>
    %cst_13 = arith.constant 1.000000e+00 : f32
    %41 = vector.broadcast %cst_13 : f32 to vector<32x1024xf32>
    %42 = arith.addf %41, %40 : vector<32x1024xf32>
    %43 = arith.divf %41, %42 : vector<32x1024xf32>
    %44 = arith.mulf %35, %37 : vector<32x1024xf32>
    %45 = math.tanh %44 : vector<32x1024xf32>
    %46 = arith.mulf %43, %45 : vector<32x1024xf32>
    %c0_14 = arith.constant 0 : index
    %c0_15 = arith.constant 0 : index
    %47 = vector.load %arg6[%c0_14, %c0_15] : memref<32x1024xf32, #tpu.memory_space<vmem>>, vector<32x1024xf32>
    tpu.vector_store %arg6[%c0_14, %c0_15], %46 {strides = array<i32>} : memref<32x1024xf32, #tpu.memory_space<vmem>>, vector<32x1024xf32>,
    %48 = tpu.iota {dimensions = array<i32: 1>} : vector<32x1024xi32>
    %c1024_i32 = arith.constant 1024 : i32
    %49 = arith.muli %arg0, %c1024_i32 : i32
    %50 = vector.broadcast %49 : i32 to vector<32x1024xi32>
    %51 = arith.addi %50, %48 : vector<32x1024xi32>
    %c8_i32 = arith.constant 8 : i32
    %52 = vector.broadcast %c8_i32 : i32 to vector<32x1024xi32>
    %53 = arith.cmpi slt, %51, %52 : vector<32x1024xi32>
    %cst_16 = arith.constant 0.000000e+00 : f32
    %54 = vector.broadcast %cst_16 : f32 to vector<32x1024xf32>
    %55 = arith.select %53, %46, %54 : vector<32x1024xi1>, vector<32x1024xf32>
    %cst_17 = arith.constant dense<0.000000e+00> : vector<32xf32>
    %56 = vector.multi_reduction <add>, %55, %cst_17 [1] : vector<32x1024xf32> to vector<32xf32>
    %57 = vector.shape_cast %56 : vector<32xf32> to vector<32x1xf32>
    %58 = vector.shape_cast %57 : vector<32x1xf32> to vector<1x32x1xf32>
    %c0_18 = arith.constant 0 : index
    %c0_19 = arith.constant 0 : index
    %c0_20 = arith.constant 0 : index
    %59 = vector.load %arg7[%c0_18, %c0_19, %c0_20] : memref<1x32x1xf32, #tpu.memory_space<vmem>>, vector<1x32x1xf32>
    tpu.vector_store %arg7[%c0_18, %c0_19, %c0_20], %58 {strides = array<i32>} : memref<1x32x1xf32, #tpu.memory_space<vmem>>, vector<1x32x1xf32>,
    %60 = arith.mulf %55, %55 : vector<32x1024xf32>
    %cst_21 = arith.constant dense<0.000000e+00> : vector<32xf32>
    %61 = vector.multi_reduction <add>, %60, %cst_21 [1] : vector<32x1024xf32> to vector<32xf32>
    %62 = vector.shape_cast %61 : vector<32xf32> to vector<32x1xf32>
    %63 = vector.shape_cast %62 : vector<32x1xf32> to vector<1x32x1xf32>
    %c0_22 = arith.constant 0 : index
    %c0_23 = arith.constant 0 : index
    %c0_24 = arith.constant 0 : index
    %64 = vector.load %arg8[%c0_22, %c0_23, %c0_24] : memref<1x32x1xf32, #tpu.memory_space<vmem>>, vector<1x32x1xf32>
    tpu.vector_store %arg8[%c0_22, %c0_23, %c0_24], %63 {strides = array<i32>} : memref<1x32x1xf32, #tpu.memory_space<vmem>>, vector<1x32x1xf32>,
    return
  }
  func.func @transform_0(%arg0: i32) -> (i32, i32) {
    %c0_i32 = arith.constant 0 : i32
    %c0_i32_0 = arith.constant 0 : i32
    return %c0_i32, %arg0 : i32, i32
  }
  func.func @transform_1(%arg0: i32) -> (i32, i32) {
    %c0_i32 = arith.constant 0 : i32
    %c0_i32_0 = arith.constant 0 : i32
    %c0_i32_1 = arith.constant 0 : i32
    return %c0_i32, %c0_i32_0 : i32, i32
  }
  func.func @transform_2(%arg0: i32) -> (i32, i32) {
    %c0_i32 = arith.constant 0 : i32
    %c0_i32_0 = arith.constant 0 : i32
    %c0_i32_1 = arith.constant 0 : i32
    return %c0_i32, %c0_i32_0 : i32, i32
  }
  func.func @transform_3(%arg0: i32) -> (i32, i32) {
    %c0_i32 = arith.constant 0 : i32
    %c0_i32_0 = arith.constant 0 : i32
    %c0_i32_1 = arith.constant 0 : i32
    return %c0_i32, %c0_i32_0 : i32, i32
  }
  func.func @transform_4(%arg0: i32) -> (i32, i32) {
    %c0_i32 = arith.constant 0 : i32
    %c0_i32_0 = arith.constant 0 : i32
    %c0_i32_1 = arith.constant 0 : i32
    return %c0_i32, %c0_i32_0 : i32, i32
  }
  func.func @transform_5(%arg0: i32) -> (i32, i32) {
    %c0_i32 = arith.constant 0 : i32
    %c0_i32_0 = arith.constant 0 : i32
    return %c0_i32, %arg0 : i32, i32
  }
  func.func @transform_6(%arg0: i32) -> (i32, i32, i32) {
    %c0_i32 = arith.constant 0 : i32
    %c0_i32_0 = arith.constant 0 : i32
    %c0_i32_1 = arith.constant 0 : i32
    return %arg0, %c0_i32, %c0_i32_0 : i32, i32, i32
  }
  func.func @transform_7(%arg0: i32) -> (i32, i32, i32) {
    %c0_i32 = arith.constant 0 : i32
    %c0_i32_0 = arith.constant 0 : i32
    %c0_i32_1 = arith.constant 0 : i32
    return %arg0, %c0_i32, %c0_i32_0 : i32, i32, i32
  }
}

</mosaic_0001>

<llo_original>
// kernel: tpu_custom_call.1
$region0: #{tpu_custom_call.1}
  #allocation0 [shape = 'u32[]', space=smem, size = 0x4, offset = 0x4, fixed_abs, tag = 'smem constant byte address 0x4 - core index']
  #allocation1 [shape = 'u32[144,128]{1,0:T(1,128)}', space=vmem, size = 0x12000, scoped, tag = 'internal scratch']
  %s0 = inlined_call_operand.vmem [shape: f32[11,1024], index: 0, kind: input, shape index: {}]
  %s1 = inlined_call_operand.vmem [shape: bf16[96,11], index: 1, kind: input, shape index: {}]
  %s2 = inlined_call_operand.vmem [shape: f32[96,1], index: 2, kind: input, shape index: {}]
  %s3 = inlined_call_operand.vmem [shape: bf16[96,32], index: 3, kind: input, shape index: {}]
  %s4 = inlined_call_operand.vmem [shape: f32[96,1], index: 4, kind: input, shape index: {}]
  %s5 = inlined_call_operand.hbm [shape: f32[32,1024], index: 5, kind: output, shape index: {0}]
  %s6 = inlined_call_operand.vmem [shape: f32[1,32,1], index: 6, kind: output, shape index: {1}]
  %s7 = inlined_call_operand.vmem [shape: f32[1,32,1], index: 7, kind: output, shape index: {2}]
  %8 = xla_tuple %s5, %s6, %s7
  %s9 = sld [smem:[#allocation0]]
  $region46: #{tpu_custom_call.1} parent=0
    _
  %s11 = ssub.s32 1, %s9
  %s12 = scalar_select 0, %s11, %s9
  $region1: #{tpu_custom_call.1} parent=0
    #allocation2 [shape = 'u8[131072]{0}', space=vmem, size = 0x20000, scoped, tag = 'output window, operand 0, single buffered']
    #allocation3 [shape = 's32[1]{0}', space=sflag, size = 0x4, scoped, tag = 'scoped memory for tpu_custom_call.1']
    %13 = vsyncpa [#allocation3], 0
    // Predicated region
    $region2: #{tpu_custom_call.1} parent=1 // pred_check
      _
    $region3: #{tpu_custom_call.1} parent=1 // pred_check_branch
      %15 = sbr.rel (0) target = $region5
    $region4: #{tpu_custom_call.1} parent=1 // pred_region
      _
    $region5: #{tpu_custom_call.1} parent=1 // pred_fallthru
      _
    // Predicated region
    $region6: #{tpu_custom_call.1} parent=1 // pred_check
      _
    $region7: #{tpu_custom_call.1} parent=1 // pred_check_branch
      %17 = sbr.rel (0) target = $region9
    $region8: #{tpu_custom_call.1} parent=1 // pred_region
      _
    $region9: #{tpu_custom_call.1} parent=1 // pred_fallthru
      _
    // Predicated region
    $region10: #{tpu_custom_call.1} parent=1 // pred_check
      _
    $region11: #{tpu_custom_call.1} parent=1 // pred_check_branch
      %19 = sbr.rel (0) target = $region13
    $region12: #{tpu_custom_call.1} parent=1 // pred_region
      _
    $region13: #{tpu_custom_call.1} parent=1 // pred_fallthru
      _
    // Predicated region
    $region14: #{tpu_custom_call.1} parent=1 // pred_check
      _
    $region15: #{tpu_custom_call.1} parent=1 // pred_check_branch
      %21 = sbr.rel (0) target = $region17
    $region16: #{tpu_custom_call.1} parent=1 // pred_region
      _
    $region17: #{tpu_custom_call.1} parent=1 // pred_fallthru
      _
    // Predicated region
    $region18: #{tpu_custom_call.1} parent=1 // pred_check
      _
    $region19: #{tpu_custom_call.1} parent=1 // pred_check_branch
      %23 = sbr.rel (0) target = $region21
    $region20: #{tpu_custom_call.1} parent=1 // pred_region
      _
    $region21: #{tpu_custom_call.1} parent=1 // pred_fallthru
      _
    %v25 = vld [vmem:[%s0] sm:$0xff]
    %v26 = vld [vmem:[%s0 + $0x8] sm:$0xff]
    %v27 = vld [vmem:[%s0 + $0x10] sm:$0xff]
    %v28 = vld [vmem:[%s0 + $0x18] sm:$0xff]
    %v29 = vld [vmem:[%s0 + $0x20] sm:$0xff]
    %v30 = vld [vmem:[%s0 + $0x28] sm:$0xff]
    %v31 = vld [vmem:[%s0 + $0x30] sm:$0xff]
    %v32 = vld [vmem:[%s0 + $0x38] sm:$0xff]
    %v33 = vld [vmem:[%s0 + $0x40] sm:$0x7]
    %v34 = vld [vmem:[%s0 + $0x48] sm:$0x7]
    %v35 = vld [vmem:[%s0 + $0x50] sm:$0x7]
    %v36 = vld [vmem:[%s0 + $0x58] sm:$0x7]
    %v37 = vld [vmem:[%s0 + $0x60] sm:$0x7]
    %v38 = vld [vmem:[%s0 + $0x68] sm:$0x7]
    %v39 = vld [vmem:[%s0 + $0x70] sm:$0x7]
    %v40 = vld [vmem:[%s0 + $0x78] sm:$0x7]
    %v41 = vpack.c.bf16 %v33, %v25
    %v42 = vpack.c.bf16 %v34, %v26
    %v43 = vpack.c.bf16 %v35, %v27
    %v44 = vpack.c.bf16 %v36, %v28
    %v45 = vpack.c.bf16 %v37, %v29
    %v46 = vpack.c.bf16 %v38, %v30
    %v47 = vpack.c.bf16 %v39, %v31
    %v48 = vpack.c.bf16 %v40, %v32
    %v49 = vld [vmem:[%s1] sm:$0xf]
    %v50 = vld [vmem:[%s1 + $0x4] sm:$0xf]
    %v51 = vld [vmem:[%s1 + $0x8] sm:$0xf]
    %v52 = vld [vmem:[%s1 + $0xc] sm:$0xf]
    %v53 = vld [vmem:[%s1 + $0x10] sm:$0xf]
    %v54 = vld [vmem:[%s1 + $0x14] sm:$0xf]
    %v55 = vld [vmem:[%s1 + $0x18] sm:$0xf]
    %v56 = vld [vmem:[%s1 + $0x1c] sm:$0xf]
    %v57 = vld [vmem:[%s1 + $0x20] sm:$0xf]
    %v58 = vld [vmem:[%s1 + $0x24] sm:$0xf]
    %v59 = vld [vmem:[%s1 + $0x28] sm:$0xf]
    %v60 = vld [vmem:[%s1 + $0x2c] sm:$0xf]
    %v61 = vld [vmem:[%s2] sm:$0xff]
    %v62 = vld [vmem:[%s2 + $0x8] sm:$0xff]
    %v63 = vld [vmem:[%s2 + $0x10] sm:$0xff]
    %v64 = vld [vmem:[%s2 + $0x18] sm:$0xff]
    %v65 = vld [vmem:[%s2 + $0x20] sm:$0xff]
    %v66 = vld [vmem:[%s2 + $0x28] sm:$0xff]
    %v67 = vld [vmem:[%s2 + $0x30] sm:$0xff]
    %v68 = vld [vmem:[%s2 + $0x38] sm:$0xff]
    %v69 = vld [vmem:[%s2 + $0x40] sm:$0xff]
    %v70 = vld [vmem:[%s2 + $0x48] sm:$0xff]
    %v71 = vld [vmem:[%s2 + $0x50] sm:$0xff]
    %v72 = vld [vmem:[%s2 + $0x58] sm:$0xff]
    %74 = vset.pattern.permute.xlu0 0
    %75 = vperm.xlu0 %74, %v61
    %v76 = vpop.permute.xlu0 %75
    %79 = vset.pattern.permute.xlu0 0
    %80 = vperm.xlu0 %79, %v62
    %v81 = vpop.permute.xlu0 %80
    %84 = vset.pattern.permute.xlu0 0
    %85 = vperm.xlu0 %84, %v63
    %v86 = vpop.permute.xlu0 %85
    %89 = vset.pattern.permute.xlu0 0
    %90 = vperm.xlu0 %89, %v64
    %v91 = vpop.permute.xlu0 %90
    %94 = vset.pattern.permute.xlu0 0
    %95 = vperm.xlu0 %94, %v65
    %v96 = vpop.permute.xlu0 %95
    %99 = vset.pattern.permute.xlu0 0
    %100 = vperm.xlu0 %99, %v66
    %v101 = vpop.permute.xlu0 %100
    %104 = vset.pattern.permute.xlu0 0
    %105 = vperm.xlu0 %104, %v67
    %v106 = vpop.permute.xlu0 %105
    %109 = vset.pattern.permute.xlu0 0
    %110 = vperm.xlu0 %109, %v68
    %v111 = vpop.permute.xlu0 %110
    %114 = vset.pattern.permute.xlu0 0
    %115 = vperm.xlu0 %114, %v69
    %v116 = vpop.permute.xlu0 %115
    %119 = vset.pattern.permute.xlu0 0
    %120 = vperm.xlu0 %119, %v70
    %v121 = vpop.permute.xlu0 %120
    %124 = vset.pattern.permute.xlu0 0
    %125 = vperm.xlu0 %124, %v71
    %v126 = vpop.permute.xlu0 %125
    %129 = vset.pattern.permute.xlu0 0
    %130 = vperm.xlu0 %129, %v72
    %v131 = vpop.permute.xlu0 %130
    %v145 = vunpack.c.l.b16 %v49
    %v146 = vunpack.c.l.b16 %v50
    %v147 = vunpack.c.l.b16 %v51
    %v148 = vunpack.c.l.b16 %v52
    %v149 = vunpack.c.l.b16 %v53
    %v150 = vunpack.c.l.b16 %v54
    %v151 = vunpack.c.l.b16 %v55
    %v152 = vunpack.c.l.b16 %v56
    %v153 = vunpack.c.l.b16 %v57
    %v154 = vunpack.c.l.b16 %v58
    %v155 = vunpack.c.l.b16 %v59
    %v156 = vunpack.c.l.b16 %v60
    %v157 = vpack.c.b16 %v146, %v145
    %v158 = vpack.c.b16 %v148, %v147
    %v159 = vpack.c.b16 %v150, %v149
    %v160 = vpack.c.b16 %v152, %v151
    %v161 = vpack.c.b16 %v154, %v153
    %v162 = vpack.c.b16 %v156, %v155
    %vm163 = vcmask 89088
    %v165 = vsel %vm163, %v157, 0
    %v168 = vsel %vm163, %v158, 0
    %v171 = vsel %vm163, %v159, 0
    %v174 = vsel %vm163, %v160, 0
    %v177 = vsel %vm163, %v161, 0
    %v180 = vsel %vm163, %v162, 0
    %vm182 = vcmask 1044480
    %vm183 = vcmask 1045504
    %v184 = vsel %vm182, 4294967295, 65535
    %v185 = vsel %vm183, %v184, 0
    %v187 = vand.u32 %v41, %v185
    %v190 = vand.u32 %v42, %v185
    %v193 = vand.u32 %v43, %v185
    %v196 = vand.u32 %v44, %v185
    %v199 = vand.u32 %v45, %v185
    %v202 = vand.u32 %v46, %v185
    %v205 = vand.u32 %v47, %v185
    %v208 = vand.u32 %v48, %v185
    %210 = vmatprep.subr.bf16.mxu0 %v190
    %211 = vmatpush1.bf16.msra.mxu0 %v187
    %212 = vmatprep.subr.bf16.mxu0 0
    %213 = vmatpush1.bf16.msra.mxu0 0
    %214 = vmatprep.subr.bf16.mxu0 0
    %215 = vmatpush1.bf16.msra.mxu0 0
    %216 = vmatprep.subr.bf16.mxu0 0
    %217 = vmatpush1.bf16.msra.mxu0 0
    %218 = vmatprep.subr.bf16.mxu0 0
    %219 = vmatpush1.bf16.msra.mxu0 0
    %220 = vmatprep.subr.bf16.mxu0 0
    %221 = vmatpush1.bf16.msra.mxu0 0
    %222 = vmatprep.subr.bf16.mxu0 0
    %223 = vmatpush1.bf16.msra.mxu0 0
    %224 = vmatprep.subr.bf16.mxu0 0
    %225 = vmatpush1.bf16.msra.mxu0 0
    %226 = vmatprep.subr.bf16.mxu0 0
    %227 = vmatpush1.bf16.msra.mxu0 0
    %228 = vmatprep.subr.bf16.mxu0 0
    %229 = vmatpush1.bf16.msra.mxu0 0
    %230 = vmatprep.subr.bf16.mxu0 0
    %231 = vmatpush1.bf16.msra.mxu0 0
    %232 = vmatprep.subr.bf16.mxu0 0
    %233 = vmatpush1.bf16.msra.mxu0 0
    %234 = vmatprep.subr.bf16.mxu0 0
    %235 = vmatpush1.bf16.msra.mxu0 0
    %236 = vmatprep.subr.bf16.mxu0 0
    %237 = vmatpush1.bf16.msra.mxu0 0
    %238 = vmatprep.subr.bf16.mxu0 0
    %239 = vmatpush1.bf16.msra.mxu0 0
    %240 = vmatprep.subr.bf16.mxu0 0
    %241 = vmatpush1.bf16.msra.mxu0 0
    %242 = vmatprep.mubr.bf16.mxu0 0
    %243 = vmatmul.mubr.bf16.gmra.mrb[0].mxu0 %v165
    %v244 = vpop.f32.mrb[0].mxu0
    %v245 = vadd.f32 %v76, %v244
    %v246 = vpop.f32.mrb[0].mxu0
    %v247 = vadd.f32 %v76, %v246
    %v248 = vpop.f32.mrb[0].mxu0
    %v249 = vadd.f32 %v81, %v248
    %v250 = vpop.f32.mrb[0].mxu0
    %v251 = vadd.f32 %v81, %v250
    %252 = vmatprep.mubr.bf16.mxu0 0
    %253 = vmatmul.mubr.bf16.gmra.mrb[0].mxu0 %v168
    %v254 = vpop.f32.mrb[0].mxu0
    %v255 = vadd.f32 %v86, %v254
    %v256 = vpop.f32.mrb[0].mxu0
    %v257 = vadd.f32 %v86, %v256
    %v258 = vpop.f32.mrb[0].mxu0
    %v259 = vadd.f32 %v91, %v258
    %v260 = vpop.f32.mrb[0].mxu0
    %v261 = vadd.f32 %v91, %v260
    %262 = vmatprep.mubr.bf16.mxu0 0
    %263 = vmatmul.mubr.bf16.gmra.mrb[0].mxu0 %v171
    %v264 = vpop.f32.mrb[0].mxu0
    %v265 = vadd.f32 %v96, %v264
    %v266 = vpop.f32.mrb[0].mxu0
    %v267 = vadd.f32 %v96, %v266
    %v268 = vpop.f32.mrb[0].mxu0
    %v269 = vadd.f32 %v101, %v268
    %v270 = vpop.f32.mrb[0].mxu0
    %v271 = vadd.f32 %v101, %v270
    %272 = vmatprep.mubr.bf16.mxu0 0
    %273 = vmatmul.mubr.bf16.gmra.mrb[0].mxu0 %v174
    %v274 = vpop.f32.mrb[0].mxu0
    %v275 = vadd.f32 %v106, %v274
    %v276 = vpop.f32.mrb[0].mxu0
    %v277 = vadd.f32 %v106, %v276
    %v278 = vpop.f32.mrb[0].mxu0
    %v279 = vadd.f32 %v111, %v278
    %v280 = vpop.f32.mrb[0].mxu0
    %v281 = vadd.f32 %v111, %v280
    %282 = vmatprep.mubr.bf16.mxu0 0
    %283 = vmatmul.mubr.bf16.gmra.mrb[0].mxu0 %v177
    %v284 = vpop.f32.mrb[0].mxu0
    %v285 = vadd.f32 %v116, %v284
    %v286 = vpop.f32.mrb[0].mxu0
    %v287 = vadd.f32 %v116, %v286
    %v288 = vpop.f32.mrb[0].mxu0
    %v289 = vadd.f32 %v121, %v288
    %v290 = vpop.f32.mrb[0].mxu0
    %v291 = vadd.f32 %v121, %v290
    %292 = vmatprep.mubr.bf16.mxu0 0
    %293 = vmatmul.mubr.bf16.gmra.mrb[0].mxu0 %v180
    %v294 = vpop.f32.mrb[0].mxu0
    %v295 = vadd.f32 %v126, %v294
    %v296 = vpop.f32.mrb[0].mxu0
    %v297 = vadd.f32 %v126, %v296
    %v298 = vpop.f32.mrb[0].mxu0
    %v299 = vadd.f32 %v131, %v298
    %v300 = vpop.f32.mrb[0].mxu0
    %v301 = vadd.f32 %v131, %v300
    %302 = vdwg.mxu0
    %303 = vmatprep.subr.bf16.mxu0 %v196
    %304 = vmatpush1.bf16.msra.mxu0 %v193
    %305 = vmatprep.subr.bf16.mxu0 0
    %306 = vmatpush1.bf16.msra.mxu0 0
    %307 = vmatprep.subr.bf16.mxu0 0
    %308 = vmatpush1.bf16.msra.mxu0 0
    %309 = vmatprep.subr.bf16.mxu0 0
    %310 = vmatpush1.bf16.msra.mxu0 0
    %311 = vmatprep.subr.bf16.mxu0 0
    %312 = vmatpush1.bf16.msra.mxu0 0
    %313 = vmatprep.subr.bf16.mxu0 0
    %314 = vmatpush1.bf16.msra.mxu0 0
    %315 = vmatprep.subr.bf16.mxu0 0
    %316 = vmatpush1.bf16.msra.mxu0 0
    %317 = vmatprep.subr.bf16.mxu0 0
    %318 = vmatpush1.bf16.msra.mxu0 0
    %319 = vmatprep.subr.bf16.mxu0 0
    %320 = vmatpush1.bf16.msra.mxu0 0
    %321 = vmatprep.subr.bf16.mxu0 0
    %322 = vmatpush1.bf16.msra.mxu0 0
    %323 = vmatprep.subr.bf16.mxu0 0
    %324 = vmatpush1.bf16.msra.mxu0 0
    %325 = vmatprep.subr.bf16.mxu0 0
    %326 = vmatpush1.bf16.msra.mxu0 0
    %327 = vmatprep.subr.bf16.mxu0 0
    %328 = vmatpush1.bf16.msra.mxu0 0
    %329 = vmatprep.subr.bf16.mxu0 0
    %330 = vmatpush1.bf16.msra.mxu0 0
    %331 = vmatprep.subr.bf16.mxu0 0
    %332 = vmatpush1.bf16.msra.mxu0 0
    %333 = vmatprep.subr.bf16.mxu0 0
    %334 = vmatpush1.bf16.msra.mxu0 0
    %335 = vmatprep.mubr.bf16.mxu0 0
    %336 = vmatmul.mubr.bf16.gmra.mrb[0].mxu0 %v165
    %v337 = vpop.f32.mrb[0].mxu0
    %v338 = vadd.f32 %v76, %v337
    %v339 = vpop.f32.mrb[0].mxu0
    %v340 = vadd.f32 %v76, %v339
    %v341 = vpop.f32.mrb[0].mxu0
    %v342 = vadd.f32 %v81, %v341
    %v343 = vpop.f32.mrb[0].mxu0
    %v344 = vadd.f32 %v81, %v343
    %345 = vmatprep.mubr.bf16.mxu0 0
    %346 = vmatmul.mubr.bf16.gmra.mrb[0].mxu0 %v168
    %v347 = vpop.f32.mrb[0].mxu0
    %v348 = vadd.f32 %v86, %v347
    %v349 = vpop.f32.mrb[0].mxu0
    %v350 = vadd.f32 %v86, %v349
    %v351 = vpop.f32.mrb[0].mxu0
    %v352 = vadd.f32 %v91, %v351
    %v353 = vpop.f32.mrb[0].mxu0
    %v354 = vadd.f32 %v91, %v353
    %355 = vmatprep.mubr.bf16.mxu0 0
    %356 = vmatmul.mubr.bf16.gmra.mrb[0].mxu0 %v171
    %v357 = vpop.f32.mrb[0].mxu0
    %v358 = vadd.f32 %v96, %v357
    %v359 = vpop.f32.mrb[0].mxu0
    %v360 = vadd.f32 %v96, %v359
    %v361 = vpop.f32.mrb[0].mxu0
    %v362 = vadd.f32 %v101, %v361
    %v363 = vpop.f32.mrb[0].mxu0
    %v364 = vadd.f32 %v101, %v363
    %365 = vmatprep.mubr.bf16.mxu0 0
    %366 = vmatmul.mubr.bf16.gmra.mrb[0].mxu0 %v174
    %v367 = vpop.f32.mrb[0].mxu0
    %v368 = vadd.f32 %v106, %v367
    %v369 = vpop.f32.mrb[0].mxu0
    %v370 = vadd.f32 %v106, %v369
    %v371 = vpop.f32.mrb[0].mxu0
    %v372 = vadd.f32 %v111, %v371
    %v373 = vpop.f32.mrb[0].mxu0
    %v374 = vadd.f32 %v111, %v373
    %375 = vmatprep.mubr.bf16.mxu0 0
    %376 = vmatmul.mubr.bf16.gmra.mrb[0].mxu0 %v177
    %v377 = vpop.f32.mrb[0].mxu0
    %v378 = vadd.f32 %v116, %v377
    %v379 = vpop.f32.mrb[0].mxu0
    %v380 = vadd.f32 %v116, %v379
    %v381 = vpop.f32.mrb[0].mxu0
    %v382 = vadd.f32 %v121, %v381
    %v383 = vpop.f32.mrb[0].mxu0
    %v384 = vadd.f32 %v121, %v383
    %385 = vmatprep.mubr.bf16.mxu0 0
    %386 = vmatmul.mubr.bf16.gmra.mrb[0].mxu0 %v180
    %v387 = vpop.f32.mrb[0].mxu0
    %v388 = vadd.f32 %v126, %v387
    %v389 = vpop.f32.mrb[0].mxu0
    %v390 = vadd.f32 %v126, %v389
    %v391 = vpop.f32.mrb[0].mxu0
    %v392 = vadd.f32 %v131, %v391
    %v393 = vpop.f32.mrb[0].mxu0
    %v394 = vadd.f32 %v131, %v393
    %395 = vdwg.mxu0
    %396 = vmatprep.subr.bf16.mxu0 %v202
    %397 = vmatpush1.bf16.msra.mxu0 %v199
    %398 = vmatprep.subr.bf16.mxu0 0
    %399 = vmatpush1.bf16.msra.mxu0 0
    %400 = vmatprep.subr.bf16.mxu0 0
    %401 = vmatpush1.bf16.msra.mxu0 0
    %402 = vmatprep.subr.bf16.mxu0 0
    %403 = vmatpush1.bf16.msra.mxu0 0
    %404 = vmatprep.subr.bf16.mxu0 0
    %405 = vmatpush1.bf16.msra.mxu0 0
    %406 = vmatprep.subr.bf16.mxu0 0
    %407 = vmatpush1.bf16.msra.mxu0 0
    %408 = vmatprep.subr.bf16.mxu0 0
    %409 = vmatpush1.bf16.msra.mxu0 0
    %410 = vmatprep.subr.bf16.mxu0 0
    %411 = vmatpush1.bf16.msra.mxu0 0
    %412 = vmatprep.subr.bf16.mxu0 0
    %413 = vmatpush1.bf16.msra.mxu0 0
    %414 = vmatprep.subr.bf16.mxu0 0
    %415 = vmatpush1.bf16.msra.mxu0 0
    %416 = vmatprep.subr.bf16.mxu0 0
    %417 = vmatpush1.bf16.msra.mxu0 0
    %418 = vmatprep.subr.bf16.mxu0 0
    %419 = vmatpush1.bf16.msra.mxu0 0
    %420 = vmatprep.subr.bf16.mxu0 0
    %421 = vmatpush1.bf16.msra.mxu0 0
    %422 = vmatprep.subr.bf16.mxu0 0
    %423 = vmatpush1.bf16.msra.mxu0 0
    %424 = vmatprep.subr.bf16.mxu0 0
    %425 = vmatpush1.bf16.msra.mxu0 0
    %426 = vmatprep.subr.bf16.mxu0 0
    %427 = vmatpush1.bf16.msra.mxu0 0
    %428 = vmatprep.mubr.bf16.mxu0 0
    %429 = vmatmul.mubr.bf16.gmra.mrb[0].mxu0 %v165
    %v430 = vpop.f32.mrb[0].mxu0
    %v431 = vadd.f32 %v76, %v430
    %v432 = vpop.f32.mrb[0].mxu0
    %v433 = vadd.f32 %v76, %v432
    %v434 = vpop.f32.mrb[0].mxu0
    %v435 = vadd.f32 %v81, %v434
    %v436 = vpop.f32.mrb[0].mxu0
    %v437 = vadd.f32 %v81, %v436
    %438 = vmatprep.mubr.bf16.mxu0 0
    %439 = vmatmul.mubr.bf16.gmra.mrb[0].mxu0 %v168
    %v440 = vpop.f32.mrb[0].mxu0
    %v441 = vadd.f32 %v86, %v440
    %v442 = vpop.f32.mrb[0].mxu0
    %v443 = vadd.f32 %v86, %v442
    %v444 = vpop.f32.mrb[0].mxu0
    %v445 = vadd.f32 %v91, %v444
    %v446 = vpop.f32.mrb[0].mxu0
    %v447 = vadd.f32 %v91, %v446
    %448 = vmatprep.mubr.bf16.mxu0 0
    %449 = vmatmul.mubr.bf16.gmra.mrb[0].mxu0 %v171
    %v450 = vpop.f32.mrb[0].mxu0
    %v451 = vadd.f32 %v96, %v450
    %v452 = vpop.f32.mrb[0].mxu0
    %v453 = vadd.f32 %v96, %v452
    %v454 = vpop.f32.mrb[0].mxu0
    %v455 = vadd.f32 %v101, %v454
    %v456 = vpop.f32.mrb[0].mxu0
    %v457 = vadd.f32 %v101, %v456
    %458 = vmatprep.mubr.bf16.mxu0 0
    %459 = vmatmul.mubr.bf16.gmra.mrb[0].mxu0 %v174
    %v460 = vpop.f32.mrb[0].mxu0
    %v461 = vadd.f32 %v106, %v460
    %v462 = vpop.f32.mrb[0].mxu0
    %v463 = vadd.f32 %v106, %v462
    %v464 = vpop.f32.mrb[0].mxu0
    %v465 = vadd.f32 %v111, %v464
    %v466 = vpop.f32.mrb[0].mxu0
    %v467 = vadd.f32 %v111, %v466
    %468 = vmatprep.mubr.bf16.mxu0 0
    %469 = vmatmul.mubr.bf16.gmra.mrb[0].mxu0 %v177
    %v470 = vpop.f32.mrb[0].mxu0
    %v471 = vadd.f32 %v116, %v470
    %v472 = vpop.f32.mrb[0].mxu0
    %v473 = vadd.f32 %v116, %v472
    %v474 = vpop.f32.mrb[0].mxu0
    %v475 = vadd.f32 %v121, %v474
    %v476 = vpop.f32.mrb[0].mxu0
    %v477 = vadd.f32 %v121, %v476
    %478 = vmatprep.mubr.bf16.mxu0 0
    %479 = vmatmul.mubr.bf16.gmra.mrb[0].mxu0 %v180
    %v480 = vpop.f32.mrb[0].mxu0
    %v481 = vadd.f32 %v126, %v480
    %v482 = vpop.f32.mrb[0].mxu0
    %v483 = vadd.f32 %v126, %v482
    %v484 = vpop.f32.mrb[0].mxu0
    %v485 = vadd.f32 %v131, %v484
    %v486 = vpop.f32.mrb[0].mxu0
    %v487 = vadd.f32 %v131, %v486
    %488 = vdwg.mxu0
    %489 = vmatprep.subr.bf16.mxu0 %v208
    %490 = vmatpush1.bf16.msra.mxu0 %v205
    %491 = vmatprep.subr.bf16.mxu0 0
    %492 = vmatpush1.bf16.msra.mxu0 0
    %493 = vmatprep.subr.bf16.mxu0 0
    %494 = vmatpush1.bf16.msra.mxu0 0
    %495 = vmatprep.subr.bf16.mxu0 0
    %496 = vmatpush1.bf16.msra.mxu0 0
    %497 = vmatprep.subr.bf16.mxu0 0
    %498 = vmatpush1.bf16.msra.mxu0 0
    %499 = vmatprep.subr.bf16.mxu0 0
    %500 = vmatpush1.bf16.msra.mxu0 0
    %501 = vmatprep.subr.bf16.mxu0 0
    %502 = vmatpush1.bf16.msra.mxu0 0
    %503 = vmatprep.subr.bf16.mxu0 0
    %504 = vmatpush1.bf16.msra.mxu0 0
    %505 = vmatprep.subr.bf16.mxu0 0
    %506 = vmatpush1.bf16.msra.mxu0 0
    %507 = vmatprep.subr.bf16.mxu0 0
    %508 = vmatpush1.bf16.msra.mxu0 0
    %509 = vmatprep.subr.bf16.mxu0 0
    %510 = vmatpush1.bf16.msra.mxu0 0
    %511 = vmatprep.subr.bf16.mxu0 0
    %512 = vmatpush1.bf16.msra.mxu0 0
    %513 = vmatprep.subr.bf16.mxu0 0
    %514 = vmatpush1.bf16.msra.mxu0 0
    %515 = vmatprep.subr.bf16.mxu0 0
    %516 = vmatpush1.bf16.msra.mxu0 0
    %517 = vmatprep.subr.bf16.mxu0 0
    %518 = vmatpush1.bf16.msra.mxu0 0
    %519 = vmatprep.subr.bf16.mxu0 0
    %520 = vmatpush1.bf16.msra.mxu0 0
    %521 = vmatprep.mubr.bf16.mxu0 0
    %522 = vmatmul.mubr.bf16.gmra.mrb[0].mxu0 %v165
    %v523 = vpop.f32.mrb[0].mxu0
    %v524 = vadd.f32 %v76, %v523
    %v525 = vpop.f32.mrb[0].mxu0
    %v526 = vadd.f32 %v76, %v525
    %v527 = vpop.f32.mrb[0].mxu0
    %v528 = vadd.f32 %v81, %v527
    %v529 = vpop.f32.mrb[0].mxu0
    %v530 = vadd.f32 %v81, %v529
    %531 = vmatprep.mubr.bf16.mxu0 0
    %532 = vmatmul.mubr.bf16.gmra.mrb[0].mxu0 %v168
    %v533 = vpop.f32.mrb[0].mxu0
    %v534 = vadd.f32 %v86, %v533
    %v535 = vpop.f32.mrb[0].mxu0
    %v536 = vadd.f32 %v86, %v535
    %v537 = vpop.f32.mrb[0].mxu0
    %v538 = vadd.f32 %v91, %v537
    %v539 = vpop.f32.mrb[0].mxu0
    %v540 = vadd.f32 %v91, %v539
    %541 = vmatprep.mubr.bf16.mxu0 0
    %542 = vmatmul.mubr.bf16.gmra.mrb[0].mxu0 %v171
    %v543 = vpop.f32.mrb[0].mxu0
    %v544 = vadd.f32 %v96, %v543
    %v545 = vpop.f32.mrb[0].mxu0
    %v546 = vadd.f32 %v96, %v545
    %v547 = vpop.f32.mrb[0].mxu0
    %v548 = vadd.f32 %v101, %v547
    %v549 = vpop.f32.mrb[0].mxu0
    %v550 = vadd.f32 %v101, %v549
    %551 = vmatprep.mubr.bf16.mxu0 0
    %552 = vmatmul.mubr.bf16.gmra.mrb[0].mxu0 %v174
    %v553 = vpop.f32.mrb[0].mxu0
    %v554 = vadd.f32 %v106, %v553
    %v555 = vpop.f32.mrb[0].mxu0
    %v556 = vadd.f32 %v106, %v555
    %v557 = vpop.f32.mrb[0].mxu0
    %v558 = vadd.f32 %v111, %v557
    %v559 = vpop.f32.mrb[0].mxu0
    %v560 = vadd.f32 %v111, %v559
    %561 = vmatprep.mubr.bf16.mxu0 0
    %562 = vmatmul.mubr.bf16.gmra.mrb[0].mxu0 %v177
    %v563 = vpop.f32.mrb[0].mxu0
    %v564 = vadd.f32 %v116, %v563
    %v565 = vpop.f32.mrb[0].mxu0
    %v566 = vadd.f32 %v116, %v565
    %v567 = vpop.f32.mrb[0].mxu0
    %v568 = vadd.f32 %v121, %v567
    %v569 = vpop.f32.mrb[0].mxu0
    %v570 = vadd.f32 %v121, %v569
    %571 = vmatprep.mubr.bf16.mxu0 0
    %572 = vmatmul.mubr.bf16.gmra.mrb[0].mxu0 %v180
    %v573 = vpop.f32.mrb[0].mxu0
    %v574 = vadd.f32 %v126, %v573
    %v575 = vpop.f32.mrb[0].mxu0
    %v576 = vadd.f32 %v126, %v575
    %v577 = vpop.f32.mrb[0].mxu0
    %v578 = vadd.f32 %v131, %v577
    %v579 = vpop.f32.mrb[0].mxu0
    %v580 = vadd.f32 %v131, %v579
    %581 = vdwg.mxu0
    %v582 = vxor.u32 %v245, 2147483648
    %v583 = vxor.u32 %v247, 2147483648
    %v584 = vxor.u32 %v338, 2147483648
    %v585 = vxor.u32 %v340, 2147483648
    %v586 = vxor.u32 %v431, 2147483648
    %v587 = vxor.u32 %v433, 2147483648
    %v588 = vxor.u32 %v524, 2147483648
    %v589 = vxor.u32 %v526, 2147483648
    %v590 = vxor.u32 %v249, 2147483648
    %v591 = vxor.u32 %v251, 2147483648
    %v592 = vxor.u32 %v342, 2147483648
    %v593 = vxor.u32 %v344, 2147483648
    %v594 = vxor.u32 %v435, 2147483648
    %v595 = vxor.u32 %v437, 2147483648
    %v596 = vxor.u32 %v528, 2147483648
    %v597 = vxor.u32 %v530, 2147483648
    %v598 = vxor.u32 %v255, 2147483648
    %v599 = vxor.u32 %v257, 2147483648
    %v600 = vxor.u32 %v348, 2147483648
    %v601 = vxor.u32 %v350, 2147483648
    %v602 = vxor.u32 %v441, 2147483648
    %v603 = vxor.u32 %v443, 2147483648
    %v604 = vxor.u32 %v534, 2147483648
    %v605 = vxor.u32 %v536, 2147483648
    %v606 = vxor.u32 %v259, 2147483648
    %v607 = vxor.u32 %v261, 2147483648
    %v608 = vxor.u32 %v352, 2147483648
    %v609 = vxor.u32 %v354, 2147483648
    %v610 = vxor.u32 %v445, 2147483648
    %v611 = vxor.u32 %v447, 2147483648
    %v612 = vxor.u32 %v538, 2147483648
    %v613 = vxor.u32 %v540, 2147483648
    %v614 = vmul.f32 %v582, 1.442695
    %v615 = vpow.pop %v614
    %v616 = vmul.f32 %v583, 1.442695
    %v617 = vpow.pop %v616
    %v618 = vmul.f32 %v584, 1.442695
    %v619 = vpow.pop %v618
    %v620 = vmul.f32 %v585, 1.442695
    %v621 = vpow.pop %v620
    %v622 = vmul.f32 %v586, 1.442695
    %v623 = vpow.pop %v622
    %v624 = vmul.f32 %v587, 1.442695
    %v625 = vpow.pop %v624
    %v626 = vmul.f32 %v588, 1.442695
    %v627 = vpow.pop %v626
    %v628 = vmul.f32 %v589, 1.442695
    %v629 = vpow.pop %v628
    %v630 = vmul.f32 %v590, 1.442695
    %v631 = vpow.pop %v630
    %v632 = vmul.f32 %v591, 1.442695
    %v633 = vpow.pop %v632
    %v634 = vmul.f32 %v592, 1.442695
    %v635 = vpow.pop %v634
    %v636 = vmul.f32 %v593, 1.442695
    %v637 = vpow.pop %v636
    %v638 = vmul.f32 %v594, 1.442695
    %v639 = vpow.pop %v638
    %v640 = vmul.f32 %v595, 1.442695
    %v641 = vpow.pop %v640
    %v642 = vmul.f32 %v596, 1.442695
    %v643 = vpow.pop %v642
    %v644 = vmul.f32 %v597, 1.442695
    %v645 = vpow.pop %v644
    %v646 = vmul.f32 %v598, 1.442695
    %v647 = vpow.pop %v646
    %v648 = vmul.f32 %v599, 1.442695
    %v649 = vpow.pop %v648
    %v650 = vmul.f32 %v600, 1.442695
    %v651 = vpow.pop %v650
    %v652 = vmul.f32 %v601, 1.442695
    %v653 = vpow.pop %v652
    %v654 = vmul.f32 %v602, 1.442695
    %v655 = vpow.pop %v654
    %v656 = vmul.f32 %v603, 1.442695
    %v657 = vpow.pop %v656
    %v658 = vmul.f32 %v604, 1.442695
    %v659 = vpow.pop %v658
    %v660 = vmul.f32 %v605, 1.442695
    %v661 = vpow.pop %v660
    %v662 = vmul.f32 %v606, 1.442695
    %v663 = vpow.pop %v662
    %v664 = vmul.f32 %v607, 1.442695
    %v665 = vpow.pop %v664
    %v666 = vmul.f32 %v608, 1.442695
    %v667 = vpow.pop %v666
    %v668 = vmul.f32 %v609, 1.442695
    %v669 = vpow.pop %v668
    %v670 = vmul.f32 %v610, 1.442695
    %v671 = vpow.pop %v670
    %v672 = vmul.f32 %v611, 1.442695
    %v673 = vpow.pop %v672
    %v674 = vmul.f32 %v612, 1.442695
    %v675 = vpow.pop %v674
    %v676 = vmul.f32 %v613, 1.442695
    %v677 = vpow.pop %v676
    %v678 = vadd.f32 %v615, 1.0
    %v679 = vadd.f32 %v617, 1.0
    %v680 = vadd.f32 %v619, 1.0
    %v681 = vadd.f32 %v621, 1.0
    %v682 = vadd.f32 %v623, 1.0
    %v683 = vadd.f32 %v625, 1.0
    %v684 = vadd.f32 %v627, 1.0
    %v685 = vadd.f32 %v629, 1.0
    %v686 = vadd.f32 %v631, 1.0
    %v687 = vadd.f32 %v633, 1.0
    %v688 = vadd.f32 %v635, 1.0
    %v689 = vadd.f32 %v637, 1.0
    %v690 = vadd.f32 %v639, 1.0
    %v691 = vadd.f32 %v641, 1.0
    %v692 = vadd.f32 %v643, 1.0
    %v693 = vadd.f32 %v645, 1.0
    %v694 = vadd.f32 %v647, 1.0
    %v695 = vadd.f32 %v649, 1.0
    %v696 = vadd.f32 %v651, 1.0
    %v697 = vadd.f32 %v653, 1.0
    %v698 = vadd.f32 %v655, 1.0
    %v699 = vadd.f32 %v657, 1.0
    %v700 = vadd.f32 %v659, 1.0
    %v701 = vadd.f32 %v661, 1.0
    %v702 = vadd.f32 %v663, 1.0
    %v703 = vadd.f32 %v665, 1.0
    %v704 = vadd.f32 %v667, 1.0
    %v705 = vadd.f32 %v669, 1.0
    %v706 = vadd.f32 %v671, 1.0
    %v707 = vadd.f32 %v673, 1.0
    %v708 = vadd.f32 %v675, 1.0
    %v709 = vadd.f32 %v677, 1.0
    %v710 = vrcp.pop %v678
    %v711 = vmul.f32 1.0, %v710
    %v712 = vrcp.pop %v679
    %v713 = vmul.f32 1.0, %v712
    %v714 = vrcp.pop %v680
    %v715 = vmul.f32 1.0, %v714
    %v716 = vrcp.pop %v681
    %v717 = vmul.f32 1.0, %v716
    %v718 = vrcp.pop %v682
    %v719 = vmul.f32 1.0, %v718
    %v720 = vrcp.pop %v683
    %v721 = vmul.f32 1.0, %v720
    %v722 = vrcp.pop %v684
    %v723 = vmul.f32 1.0, %v722
    %v724 = vrcp.pop %v685
    %v725 = vmul.f32 1.0, %v724
    %v726 = vrcp.pop %v686
    %v727 = vmul.f32 1.0, %v726
    %v728 = vrcp.pop %v687
    %v729 = vmul.f32 1.0, %v728
    %v730 = vrcp.pop %v688
    %v731 = vmul.f32 1.0, %v730
    %v732 = vrcp.pop %v689
    %v733 = vmul.f32 1.0, %v732
    %v734 = vrcp.pop %v690
    %v735 = vmul.f32 1.0, %v734
    %v736 = vrcp.pop %v691
    %v737 = vmul.f32 1.0, %v736
    %v738 = vrcp.pop %v692
    %v739 = vmul.f32 1.0, %v738
    %v740 = vrcp.pop %v693
    %v741 = vmul.f32 1.0, %v740
    %v742 = vrcp.pop %v694
    %v743 = vmul.f32 1.0, %v742
    %v744 = vrcp.pop %v695
    %v745 = vmul.f32 1.0, %v744
    %v746 = vrcp.pop %v696
    %v747 = vmul.f32 1.0, %v746
    %v748 = vrcp.pop %v697
    %v749 = vmul.f32 1.0, %v748
    %v750 = vrcp.pop %v698
    %v751 = vmul.f32 1.0, %v750
    %v752 = vrcp.pop %v699
    %v753 = vmul.f32 1.0, %v752
    %v754 = vrcp.pop %v700
    %v755 = vmul.f32 1.0, %v754
    %v756 = vrcp.pop %v701
    %v757 = vmul.f32 1.0, %v756
    %v758 = vrcp.pop %v702
    %v759 = vmul.f32 1.0, %v758
    %v760 = vrcp.pop %v703
    %v761 = vmul.f32 1.0, %v760
    %v762 = vrcp.pop %v704
    %v763 = vmul.f32 1.0, %v762
    %v764 = vrcp.pop %v705
    %v765 = vmul.f32 1.0, %v764
    %v766 = vrcp.pop %v706
    %v767 = vmul.f32 1.0, %v766
    %v768 = vrcp.pop %v707
    %v769 = vmul.f32 1.0, %v768
    %v770 = vrcp.pop %v708
    %v771 = vmul.f32 1.0, %v770
    %v772 = vrcp.pop %v709
    %v773 = vmul.f32 1.0, %v772
    %v774 = vtanh.pop %v265
    %v775 = vtanh.pop %v267
    %v776 = vtanh.pop %v358
    %v777 = vtanh.pop %v360
    %v778 = vtanh.pop %v451
    %v779 = vtanh.pop %v453
    %v780 = vtanh.pop %v544
    %v781 = vtanh.pop %v546
    %v782 = vtanh.pop %v269
    %v783 = vtanh.pop %v271
    %v784 = vtanh.pop %v362
    %v785 = vtanh.pop %v364
    %v786 = vtanh.pop %v455
    %v787 = vtanh.pop %v457
    %v788 = vtanh.pop %v548
    %v789 = vtanh.pop %v550
    %v790 = vtanh.pop %v275
    %v791 = vtanh.pop %v277
    %v792 = vtanh.pop %v368
    %v793 = vtanh.pop %v370
    %v794 = vtanh.pop %v461
    %v795 = vtanh.pop %v463
    %v796 = vtanh.pop %v554
    %v797 = vtanh.pop %v556
    %v798 = vtanh.pop %v279
    %v799 = vtanh.pop %v281
    %v800 = vtanh.pop %v372
    %v801 = vtanh.pop %v374
    %v802 = vtanh.pop %v465
    %v803 = vtanh.pop %v467
    %v804 = vtanh.pop %v558
    %v805 = vtanh.pop %v560
    %v806 = vxor.u32 %v285, 2147483648
    %v807 = vxor.u32 %v287, 2147483648
    %v808 = vxor.u32 %v378, 2147483648
    %v809 = vxor.u32 %v380, 2147483648
    %v810 = vxor.u32 %v471, 2147483648
    %v811 = vxor.u32 %v473, 2147483648
    %v812 = vxor.u32 %v564, 2147483648
    %v813 = vxor.u32 %v566, 2147483648
    %v814 = vxor.u32 %v289, 2147483648
    %v815 = vxor.u32 %v291, 2147483648
    %v816 = vxor.u32 %v382, 2147483648
    %v817 = vxor.u32 %v384, 2147483648
    %v818 = vxor.u32 %v475, 2147483648
    %v819 = vxor.u32 %v477, 2147483648
    %v820 = vxor.u32 %v568, 2147483648
    %v821 = vxor.u32 %v570, 2147483648
    %v822 = vxor.u32 %v295, 2147483648
    %v823 = vxor.u32 %v297, 2147483648
    %v824 = vxor.u32 %v388, 2147483648
    %v825 = vxor.u32 %v390, 2147483648
    %v826 = vxor.u32 %v481, 2147483648
    %v827 = vxor.u32 %v483, 2147483648
    %v828 = vxor.u32 %v574, 2147483648
    %v829 = vxor.u32 %v576, 2147483648
    %v830 = vxor.u32 %v299, 2147483648
    %v831 = vxor.u32 %v301, 2147483648
    %v832 = vxor.u32 %v392, 2147483648
    %v833 = vxor.u32 %v394, 2147483648
    %v834 = vxor.u32 %v485, 2147483648
    %v835 = vxor.u32 %v487, 2147483648
    %v836 = vxor.u32 %v578, 2147483648
    %v837 = vxor.u32 %v580, 2147483648
    %v838 = vmul.f32 %v806, 1.442695
    %v839 = vpow.pop %v838
    %v840 = vmul.f32 %v807, 1.442695
    %v841 = vpow.pop %v840
    %v842 = vmul.f32 %v808, 1.442695
    %v843 = vpow.pop %v842
    %v844 = vmul.f32 %v809, 1.442695
    %v845 = vpow.pop %v844
    %v846 = vmul.f32 %v810, 1.442695
    %v847 = vpow.pop %v846
    %v848 = vmul.f32 %v811, 1.442695
    %v849 = vpow.pop %v848
    %v850 = vmul.f32 %v812, 1.442695
    %v851 = vpow.pop %v850
    %v852 = vmul.f32 %v813, 1.442695
    %v853 = vpow.pop %v852
    %v854 = vmul.f32 %v814, 1.442695
    %v855 = vpow.pop %v854
    %v856 = vmul.f32 %v815, 1.442695
    %v857 = vpow.pop %v856
    %v858 = vmul.f32 %v816, 1.442695
    %v859 = vpow.pop %v858
    %v860 = vmul.f32 %v817, 1.442695
    %v861 = vpow.pop %v860
    %v862 = vmul.f32 %v818, 1.442695
    %v863 = vpow.pop %v862
    %v864 = vmul.f32 %v819, 1.442695
    %v865 = vpow.pop %v864
    %v866 = vmul.f32 %v820, 1.442695
    %v867 = vpow.pop %v866
    %v868 = vmul.f32 %v821, 1.442695
    %v869 = vpow.pop %v868
    %v870 = vmul.f32 %v822, 1.442695
    %v871 = vpow.pop %v870
    %v872 = vmul.f32 %v823, 1.442695
    %v873 = vpow.pop %v872
    %v874 = vmul.f32 %v824, 1.442695
    %v875 = vpow.pop %v874
    %v876 = vmul.f32 %v825, 1.442695
    %v877 = vpow.pop %v876
    %v878 = vmul.f32 %v826, 1.442695
    %v879 = vpow.pop %v878
    %v880 = vmul.f32 %v827, 1.442695
    %v881 = vpow.pop %v880
    %v882 = vmul.f32 %v828, 1.442695
    %v883 = vpow.pop %v882
    %v884 = vmul.f32 %v829, 1.442695
    %v885 = vpow.pop %v884
    %v886 = vmul.f32 %v830, 1.442695
    %v887 = vpow.pop %v886
    %v888 = vmul.f32 %v831, 1.442695
    %v889 = vpow.pop %v888
    %v890 = vmul.f32 %v832, 1.442695
    %v891 = vpow.pop %v890
    %v892 = vmul.f32 %v833, 1.442695
    %v893 = vpow.pop %v892
    %v894 = vmul.f32 %v834, 1.442695
    %v895 = vpow.pop %v894
    %v896 = vmul.f32 %v835, 1.442695
    %v897 = vpow.pop %v896
    %v898 = vmul.f32 %v836, 1.442695
    %v899 = vpow.pop %v898
    %v900 = vmul.f32 %v837, 1.442695
    %v901 = vpow.pop %v900
    %v902 = vadd.f32 %v839, 1.0
    %v903 = vadd.f32 %v841, 1.0
    %v904 = vadd.f32 %v843, 1.0
    %v905 = vadd.f32 %v845, 1.0
    %v906 = vadd.f32 %v847, 1.0
    %v907 = vadd.f32 %v849, 1.0
    %v908 = vadd.f32 %v851, 1.0
    %v909 = vadd.f32 %v853, 1.0
    %v910 = vadd.f32 %v855, 1.0
    %v911 = vadd.f32 %v857, 1.0
    %v912 = vadd.f32 %v859, 1.0
    %v913 = vadd.f32 %v861, 1.0
    %v914 = vadd.f32 %v863, 1.0
    %v915 = vadd.f32 %v865, 1.0
    %v916 = vadd.f32 %v867, 1.0
    %v917 = vadd.f32 %v869, 1.0
    %v918 = vadd.f32 %v871, 1.0
    %v919 = vadd.f32 %v873, 1.0
    %v920 = vadd.f32 %v875, 1.0
    %v921 = vadd.f32 %v877, 1.0
    %v922 = vadd.f32 %v879, 1.0
    %v923 = vadd.f32 %v881, 1.0
    %v924 = vadd.f32 %v883, 1.0
    %v925 = vadd.f32 %v885, 1.0
    %v926 = vadd.f32 %v887, 1.0
    %v927 = vadd.f32 %v889, 1.0
    %v928 = vadd.f32 %v891, 1.0
    %v929 = vadd.f32 %v893, 1.0
    %v930 = vadd.f32 %v895, 1.0
    %v931 = vadd.f32 %v897, 1.0
    %v932 = vadd.f32 %v899, 1.0
    %v933 = vadd.f32 %v901, 1.0
    %v934 = vrcp.pop %v902
    %v935 = vmul.f32 1.0, %v934
    %v936 = vrcp.pop %v903
    %v937 = vmul.f32 1.0, %v936
    %v938 = vrcp.pop %v904
    %v939 = vmul.f32 1.0, %v938
    %v940 = vrcp.pop %v905
    %v941 = vmul.f32 1.0, %v940
    %v942 = vrcp.pop %v906
    %v943 = vmul.f32 1.0, %v942
    %v944 = vrcp.pop %v907
    %v945 = vmul.f32 1.0, %v944
    %v946 = vrcp.pop %v908
    %v947 = vmul.f32 1.0, %v946
    %v948 = vrcp.pop %v909
    %v949 = vmul.f32 1.0, %v948
    %v950 = vrcp.pop %v910
    %v951 = vmul.f32 1.0, %v950
    %v952 = vrcp.pop %v911
    %v953 = vmul.f32 1.0, %v952
    %v954 = vrcp.pop %v912
    %v955 = vmul.f32 1.0, %v954
    %v956 = vrcp.pop %v913
    %v957 = vmul.f32 1.0, %v956
    %v958 = vrcp.pop %v914
    %v959 = vmul.f32 1.0, %v958
    %v960 = vrcp.pop %v915
    %v961 = vmul.f32 1.0, %v960
    %v962 = vrcp.pop %v916
    %v963 = vmul.f32 1.0, %v962
    %v964 = vrcp.pop %v917
    %v965 = vmul.f32 1.0, %v964
    %v966 = vrcp.pop %v918
    %v967 = vmul.f32 1.0, %v966
    %v968 = vrcp.pop %v919
    %v969 = vmul.f32 1.0, %v968
    %v970 = vrcp.pop %v920
    %v971 = vmul.f32 1.0, %v970
    %v972 = vrcp.pop %v921
    %v973 = vmul.f32 1.0, %v972
    %v974 = vrcp.pop %v922
    %v975 = vmul.f32 1.0, %v974
    %v976 = vrcp.pop %v923
    %v977 = vmul.f32 1.0, %v976
    %v978 = vrcp.pop %v924
    %v979 = vmul.f32 1.0, %v978
    %v980 = vrcp.pop %v925
    %v981 = vmul.f32 1.0, %v980
    %v982 = vrcp.pop %v926
    %v983 = vmul.f32 1.0, %v982
    %v984 = vrcp.pop %v927
    %v985 = vmul.f32 1.0, %v984
    %v986 = vrcp.pop %v928
    %v987 = vmul.f32 1.0, %v986
    %v988 = vrcp.pop %v929
    %v989 = vmul.f32 1.0, %v988
    %v990 = vrcp.pop %v930
    %v991 = vmul.f32 1.0, %v990
    %v992 = vrcp.pop %v931
    %v993 = vmul.f32 1.0, %v992
    %v994 = vrcp.pop %v932
    %v995 = vmul.f32 1.0, %v994
    %v996 = vrcp.pop %v933
    %v997 = vmul.f32 1.0, %v996
    %v998 = vmul.f32 %v711, %v774
    %v999 = vmul.f32 %v713, %v775
    %v1000 = vmul.f32 %v715, %v776
    %v1001 = vmul.f32 %v717, %v777
    %v1002 = vmul.f32 %v719, %v778
    %v1003 = vmul.f32 %v721, %v779
    %v1004 = vmul.f32 %v723, %v780
    %v1005 = vmul.f32 %v725, %v781
    %v1006 = vmul.f32 %v727, %v782
    %v1007 = vmul.f32 %v729, %v783
    %v1008 = vmul.f32 %v731, %v784
    %v1009 = vmul.f32 %v733, %v785
    %v1010 = vmul.f32 %v735, %v786
    %v1011 = vmul.f32 %v737, %v787
    %v1012 = vmul.f32 %v739, %v788
    %v1013 = vmul.f32 %v741, %v789
    %v1014 = vmul.f32 %v743, %v790
    %v1015 = vmul.f32 %v745, %v791
    %v1016 = vmul.f32 %v747, %v792
    %v1017 = vmul.f32 %v749, %v793
    %v1018 = vmul.f32 %v751, %v794
    %v1019 = vmul.f32 %v753, %v795
    %v1020 = vmul.f32 %v755, %v796
    %v1021 = vmul.f32 %v757, %v797
    %v1022 = vmul.f32 %v759, %v798
    %v1023 = vmul.f32 %v761, %v799
    %v1024 = vmul.f32 %v763, %v800
    %v1025 = vmul.f32 %v765, %v801
    %v1026 = vmul.f32 %v767, %v802
    %v1027 = vmul.f32 %v769, %v803
    %v1028 = vmul.f32 %v771, %v804
    %v1029 = vmul.f32 %v773, %v805
    %v1030 = vtanh.pop %v998
    %v1031 = vtanh.pop %v999
    %v1032 = vtanh.pop %v1000
    %v1033 = vtanh.pop %v1001
    %v1034 = vtanh.pop %v1002
    %v1035 = vtanh.pop %v1003
    %v1036 = vtanh.pop %v1004
    %v1037 = vtanh.pop %v1005
    %v1038 = vtanh.pop %v1006
    %v1039 = vtanh.pop %v1007
    %v1040 = vtanh.pop %v1008
    %v1041 = vtanh.pop %v1009
    %v1042 = vtanh.pop %v1010
    %v1043 = vtanh.pop %v1011
    %v1044 = vtanh.pop %v1012
    %v1045 = vtanh.pop %v1013
    %v1046 = vtanh.pop %v1014
    %v1047 = vtanh.pop %v1015
    %v1048 = vtanh.pop %v1016
    %v1049 = vtanh.pop %v1017
    %v1050 = vtanh.pop %v1018
    %v1051 = vtanh.pop %v1019
    %v1052 = vtanh.pop %v1020
    %v1053 = vtanh.pop %v1021
    %v1054 = vtanh.pop %v1022
    %v1055 = vtanh.pop %v1023
    %v1056 = vtanh.pop %v1024
    %v1057 = vtanh.pop %v1025
    %v1058 = vtanh.pop %v1026
    %v1059 = vtanh.pop %v1027
    %v1060 = vtanh.pop %v1028
    %v1061 = vtanh.pop %v1029
    %v1062 = vmul.f32 %v935, %v1030
    %v1063 = vmul.f32 %v937, %v1031
    %v1064 = vmul.f32 %v939, %v1032
    %v1065 = vmul.f32 %v941, %v1033
    %v1066 = vmul.f32 %v943, %v1034
    %v1067 = vmul.f32 %v945, %v1035
    %v1068 = vmul.f32 %v947, %v1036
    %v1069 = vmul.f32 %v949, %v1037
    %v1070 = vmul.f32 %v951, %v1038
    %v1071 = vmul.f32 %v953, %v1039
    %v1072 = vmul.f32 %v955, %v1040
    %v1073 = vmul.f32 %v957, %v1041
    %v1074 = vmul.f32 %v959, %v1042
    %v1075 = vmul.f32 %v961, %v1043
    %v1076 = vmul.f32 %v963, %v1044
    %v1077 = vmul.f32 %v965, %v1045
    %v1078 = vmul.f32 %v967, %v1046
    %v1079 = vmul.f32 %v969, %v1047
    %v1080 = vmul.f32 %v971, %v1048
    %v1081 = vmul.f32 %v973, %v1049
    %v1082 = vmul.f32 %v975, %v1050
    %v1083 = vmul.f32 %v977, %v1051
    %v1084 = vmul.f32 %v979, %v1052
    %v1085 = vmul.f32 %v981, %v1053
    %v1086 = vmul.f32 %v983, %v1054
    %v1087 = vmul.f32 %v985, %v1055
    %v1088 = vmul.f32 %v987, %v1056
    %v1089 = vmul.f32 %v989, %v1057
    %v1090 = vmul.f32 %v991, %v1058
    %v1091 = vmul.f32 %v993, %v1059
    %v1092 = vmul.f32 %v995, %v1060
    %v1093 = vmul.f32 %v997, %v1061
    %v1094 = vld [vmem:[%s3] sm:$0xf]
    %v1095 = vld [vmem:[%s3 + $0x4] sm:$0xf]
    %v1096 = vld [vmem:[%s3 + $0x8] sm:$0xf]
    %v1097 = vld [vmem:[%s3 + $0xc] sm:$0xf]
    %v1098 = vld [vmem:[%s3 + $0x10] sm:$0xf]
    %v1099 = vld [vmem:[%s3 + $0x14] sm:$0xf]
    %v1100 = vld [vmem:[%s3 + $0x18] sm:$0xf]
    %v1101 = vld [vmem:[%s3 + $0x1c] sm:$0xf]
    %v1102 = vld [vmem:[%s3 + $0x20] sm:$0xf]
    %v1103 = vld [vmem:[%s3 + $0x24] sm:$0xf]
    %v1104 = vld [vmem:[%s3 + $0x28] sm:$0xf]
    %v1105 = vld [vmem:[%s3 + $0x2c] sm:$0xf]
    %v1106 = vpack.c.bf16 %v1070, %v1062
    %v1107 = vpack.c.bf16 %v1071, %v1063
    %v1108 = vpack.c.bf16 %v1072, %v1064
    %v1109 = vpack.c.bf16 %v1073, %v1065
    %v1110 = vpack.c.bf16 %v1074, %v1066
    %v1111 = vpack.c.bf16 %v1075, %v1067
    %v1112 = vpack.c.bf16 %v1076, %v1068
    %v1113 = vpack.c.bf16 %v1077, %v1069
    %v1114 = vpack.c.bf16 %v1086, %v1078
    %v1115 = vpack.c.bf16 %v1087, %v1079
    %v1116 = vpack.c.bf16 %v1088, %v1080
    %v1117 = vpack.c.bf16 %v1089, %v1081
    %v1118 = vpack.c.bf16 %v1090, %v1082
    %v1119 = vpack.c.bf16 %v1091, %v1083
    %v1120 = vpack.c.bf16 %v1092, %v1084
    %v1121 = vpack.c.bf16 %v1093, %v1085
    %v1122 = vld [vmem:[%s4] sm:$0xff]
    %v1123 = vld [vmem:[%s4 + $0x8] sm:$0xff]
    %v1124 = vld [vmem:[%s4 + $0x10] sm:$0xff]
    %v1125 = vld [vmem:[%s4 + $0x18] sm:$0xff]
    %v1126 = vld [vmem:[%s4 + $0x20] sm:$0xff]
    %v1127 = vld [vmem:[%s4 + $0x28] sm:$0xff]
    %v1128 = vld [vmem:[%s4 + $0x30] sm:$0xff]
    %v1129 = vld [vmem:[%s4 + $0x38] sm:$0xff]
    %v1130 = vld [vmem:[%s4 + $0x40] sm:$0xff]
    %v1131 = vld [vmem:[%s4 + $0x48] sm:$0xff]
    %v1132 = vld [vmem:[%s4 + $0x50] sm:$0xff]
    %v1133 = vld [vmem:[%s4 + $0x58] sm:$0xff]
    %1135 = vset.pattern.permute.xlu0 0
    %1136 = vperm.xlu0 %1135, %v1122
    %v1137 = vpop.permute.xlu0 %1136
    %1140 = vset.pattern.permute.xlu0 0
    %1141 = vperm.xlu0 %1140, %v1123
    %v1142 = vpop.permute.xlu0 %1141
    %1145 = vset.pattern.permute.xlu0 0
    %1146 = vperm.xlu0 %1145, %v1124
    %v1147 = vpop.permute.xlu0 %1146
    %1150 = vset.pattern.permute.xlu0 0
    %1151 = vperm.xlu0 %1150, %v1125
    %v1152 = vpop.permute.xlu0 %1151
    %1155 = vset.pattern.permute.xlu0 0
    %1156 = vperm.xlu0 %1155, %v1126
    %v1157 = vpop.permute.xlu0 %1156
    %1160 = vset.pattern.permute.xlu0 0
    %1161 = vperm.xlu0 %1160, %v1127
    %v1162 = vpop.permute.xlu0 %1161
    %1165 = vset.pattern.permute.xlu0 0
    %1166 = vperm.xlu0 %1165, %v1128
    %v1167 = vpop.permute.xlu0 %1166
    %1170 = vset.pattern.permute.xlu0 0
    %1171 = vperm.xlu0 %1170, %v1129
    %v1172 = vpop.permute.xlu0 %1171
    %1175 = vset.pattern.permute.xlu0 0
    %1176 = vperm.xlu0 %1175, %v1130
    %v1177 = vpop.permute.xlu0 %1176
    %1180 = vset.pattern.permute.xlu0 0
    %1181 = vperm.xlu0 %1180, %v1131
    %v1182 = vpop.permute.xlu0 %1181
    %1185 = vset.pattern.permute.xlu0 0
    %1186 = vperm.xlu0 %1185, %v1132
    %v1187 = vpop.permute.xlu0 %1186
    %1190 = vset.pattern.permute.xlu0 0
    %1191 = vperm.xlu0 %1190, %v1133
    %v1192 = vpop.permute.xlu0 %1191
    %v1206 = vunpack.c.l.b16 %v1094
    %v1207 = vunpack.c.l.b16 %v1095
    %v1208 = vunpack.c.l.b16 %v1096
    %v1209 = vunpack.c.l.b16 %v1097
    %v1210 = vunpack.c.l.b16 %v1098
    %v1211 = vunpack.c.l.b16 %v1099
    %v1212 = vunpack.c.l.b16 %v1100
    %v1213 = vunpack.c.l.b16 %v1101
    %v1214 = vunpack.c.l.b16 %v1102
    %v1215 = vunpack.c.l.b16 %v1103
    %v1216 = vunpack.c.l.b16 %v1104
    %v1217 = vunpack.c.l.b16 %v1105
    %v1218 = vpack.c.b16 %v1207, %v1206
    %v1219 = vpack.c.b16 %v1209, %v1208
    %v1220 = vpack.c.b16 %v1211, %v1210
    %v1221 = vpack.c.b16 %v1213, %v1212
    %v1222 = vpack.c.b16 %v1215, %v1214
    %v1223 = vpack.c.b16 %v1217, %v1216
    %vm1224 = vcmask 261120
    %v1226 = vsel %vm1224, %v1218, 0
    %v1229 = vsel %vm1224, %v1219, 0
    %v1232 = vsel %vm1224, %v1220, 0
    %v1235 = vsel %vm1224, %v1221, 0
    %v1238 = vsel %vm1224, %v1222, 0
    %v1241 = vsel %vm1224, %v1223, 0
    %1243 = vmatprep.subr.bf16.mxu0 %v1107
    %1244 = vmatpush1.bf16.msra.mxu0 %v1106
    %1245 = vmatprep.subr.bf16.mxu0 %v1115
    %1246 = vmatpush1.bf16.msra.mxu0 %v1114
    %1247 = vmatprep.subr.bf16.mxu0 0
    %1248 = vmatpush1.bf16.msra.mxu0 0
    %1249 = vmatprep.subr.bf16.mxu0 0
    %1250 = vmatpush1.bf16.msra.mxu0 0
    %1251 = vmatprep.subr.bf16.mxu0 0
    %1252 = vmatpush1.bf16.msra.mxu0 0
    %1253 = vmatprep.subr.bf16.mxu0 0
    %1254 = vmatpush1.bf16.msra.mxu0 0
    %1255 = vmatprep.subr.bf16.mxu0 0
    %1256 = vmatpush1.bf16.msra.mxu0 0
    %1257 = vmatprep.subr.bf16.mxu0 0
    %1258 = vmatpush1.bf16.msra.mxu0 0
    %1259 = vmatprep.subr.bf16.mxu0 0
    %1260 = vmatpush1.bf16.msra.mxu0 0
    %1261 = vmatprep.subr.bf16.mxu0 0
    %1262 = vmatpush1.bf16.msra.mxu0 0
    %1263 = vmatprep.subr.bf16.mxu0 0
    %1264 = vmatpush1.bf16.msra.mxu0 0
    %1265 = vmatprep.subr.bf16.mxu0 0
    %1266 = vmatpush1.bf16.msra.mxu0 0
    %1267 = vmatprep.subr.bf16.mxu0 0
    %1268 = vmatpush1.bf16.msra.mxu0 0
    %1269 = vmatprep.subr.bf16.mxu0 0
    %1270 = vmatpush1.bf16.msra.mxu0 0
    %1271 = vmatprep.subr.bf16.mxu0 0
    %1272 = vmatpush1.bf16.msra.mxu0 0
    %1273 = vmatprep.subr.bf16.mxu0 0
    %1274 = vmatpush1.bf16.msra.mxu0 0
    %1275 = vmatprep.mubr.bf16.mxu0 0
    %1276 = vmatmul.mubr.bf16.gmra.mrb[0].mxu0 %v1226
    %v1277 = vpop.f32.mrb[0].mxu0
    %v1278 = vadd.f32 %v1137, %v1277
    %v1279 = vpop.f32.mrb[0].mxu0
    %v1280 = vadd.f32 %v1137, %v1279
    %v1281 = vpop.f32.mrb[0].mxu0
    %v1282 = vadd.f32 %v1142, %v1281
    %v1283 = vpop.f32.mrb[0].mxu0
    %v1284 = vadd.f32 %v1142, %v1283
    %1285 = vmatprep.mubr.bf16.mxu0 0
    %1286 = vmatmul.mubr.bf16.gmra.mrb[0].mxu0 %v1229
    %v1287 = vpop.f32.mrb[0].mxu0
    %v1288 = vadd.f32 %v1147, %v1287
    %v1289 = vpop.f32.mrb[0].mxu0
    %v1290 = vadd.f32 %v1147, %v1289
    %v1291 = vpop.f32.mrb[0].mxu0
    %v1292 = vadd.f32 %v1152, %v1291
    %v1293 = vpop.f32.mrb[0].mxu0
    %v1294 = vadd.f32 %v1152, %v1293
    %1295 = vmatprep.mubr.bf16.mxu0 0
    %1296 = vmatmul.mubr.bf16.gmra.mrb[0].mxu0 %v1232
    %v1297 = vpop.f32.mrb[0].mxu0
    %v1298 = vadd.f32 %v1157, %v1297
    %v1299 = vpop.f32.mrb[0].mxu0
    %v1300 = vadd.f32 %v1157, %v1299
    %v1301 = vpop.f32.mrb[0].mxu0
    %v1302 = vadd.f32 %v1162, %v1301
    %v1303 = vpop.f32.mrb[0].mxu0
    %v1304 = vadd.f32 %v1162, %v1303
    %1305 = vmatprep.mubr.bf16.mxu0 0
    %1306 = vmatmul.mubr.bf16.gmra.mrb[0].mxu0 %v1235
    %v1307 = vpop.f32.mrb[0].mxu0
    %v1308 = vadd.f32 %v1167, %v1307
    %v1309 = vpop.f32.mrb[0].mxu0
    %v1310 = vadd.f32 %v1167, %v1309
    %v1311 = vpop.f32.mrb[0].mxu0
    %v1312 = vadd.f32 %v1172, %v1311
    %v1313 = vpop.f32.mrb[0].mxu0
    %v1314 = vadd.f32 %v1172, %v1313
    %1315 = vmatprep.mubr.bf16.mxu0 0
    %1316 = vmatmul.mubr.bf16.gmra.mrb[0].mxu0 %v1238
    %v1317 = vpop.f32.mrb[0].mxu0
    %v1318 = vadd.f32 %v1177, %v1317
    %v1319 = vpop.f32.mrb[0].mxu0
    %v1320 = vadd.f32 %v1177, %v1319
    %v1321 = vpop.f32.mrb[0].mxu0
    %v1322 = vadd.f32 %v1182, %v1321
    %v1323 = vpop.f32.mrb[0].mxu0
    %v1324 = vadd.f32 %v1182, %v1323
    %1325 = vmatprep.mubr.bf16.mxu0 0
    %1326 = vmatmul.mubr.bf16.gmra.mrb[0].mxu0 %v1241
    %v1327 = vpop.f32.mrb[0].mxu0
    %v1328 = vadd.f32 %v1187, %v1327
    %v1329 = vpop.f32.mrb[0].mxu0
    %v1330 = vadd.f32 %v1187, %v1329
    %v1331 = vpop.f32.mrb[0].mxu0
    %v1332 = vadd.f32 %v1192, %v1331
    %v1333 = vpop.f32.mrb[0].mxu0
    %v1334 = vadd.f32 %v1192, %v1333
    %1335 = vdwg.mxu0
    %1336 = vmatprep.subr.bf16.mxu0 %v1109
    %1337 = vmatpush1.bf16.msra.mxu0 %v1108
    %1338 = vmatprep.subr.bf16.mxu0 %v1117
    %1339 = vmatpush1.bf16.msra.mxu0 %v1116
    %1340 = vmatprep.subr.bf16.mxu0 0
    %1341 = vmatpush1.bf16.msra.mxu0 0
    %1342 = vmatprep.subr.bf16.mxu0 0
    %1343 = vmatpush1.bf16.msra.mxu0 0
    %1344 = vmatprep.subr.bf16.mxu0 0
    %1345 = vmatpush1.bf16.msra.mxu0 0
    %1346 = vmatprep.subr.bf16.mxu0 0
    %1347 = vmatpush1.bf16.msra.mxu0 0
    %1348 = vmatprep.subr.bf16.mxu0 0
    %1349 = vmatpush1.bf16.msra.mxu0 0
    %1350 = vmatprep.subr.bf16.mxu0 0
    %1351 = vmatpush1.bf16.msra.mxu0 0
    %1352 = vmatprep.subr.bf16.mxu0 0
    %1353 = vmatpush1.bf16.msra.mxu0 0
    %1354 = vmatprep.subr.bf16.mxu0 0
    %1355 = vmatpush1.bf16.msra.mxu0 0
    %1356 = vmatprep.subr.bf16.mxu0 0
    %1357 = vmatpush1.bf16.msra.mxu0 0
    %1358 = vmatprep.subr.bf16.mxu0 0
    %1359 = vmatpush1.bf16.msra.mxu0 0
    %1360 = vmatprep.subr.bf16.mxu0 0
    %1361 = vmatpush1.bf16.msra.mxu0 0
    %1362 = vmatprep.subr.bf16.mxu0 0
    %1363 = vmatpush1.bf16.msra.mxu0 0
    %1364 = vmatprep.subr.bf16.mxu0 0
    %1365 = vmatpush1.bf16.msra.mxu0 0
    %1366 = vmatprep.subr.bf16.mxu0 0
    %1367 = vmatpush1.bf16.msra.mxu0 0
    %1368 = vmatprep.mubr.bf16.mxu0 0
    %1369 = vmatmul.mubr.bf16.gmra.mrb[0].mxu0 %v1226
    %v1370 = vpop.f32.mrb[0].mxu0
    %v1371 = vadd.f32 %v1137, %v1370
    %v1372 = vpop.f32.mrb[0].mxu0
    %v1373 = vadd.f32 %v1137, %v1372
    %v1374 = vpop.f32.mrb[0].mxu0
    %v1375 = vadd.f32 %v1142, %v1374
    %v1376 = vpop.f32.mrb[0].mxu0
    %v1377 = vadd.f32 %v1142, %v1376
    %1378 = vmatprep.mubr.bf16.mxu0 0
    %1379 = vmatmul.mubr.bf16.gmra.mrb[0].mxu0 %v1229
    %v1380 = vpop.f32.mrb[0].mxu0
    %v1381 = vadd.f32 %v1147, %v1380
    %v1382 = vpop.f32.mrb[0].mxu0
    %v1383 = vadd.f32 %v1147, %v1382
    %v1384 = vpop.f32.mrb[0].mxu0
    %v1385 = vadd.f32 %v1152, %v1384
    %v1386 = vpop.f32.mrb[0].mxu0
    %v1387 = vadd.f32 %v1152, %v1386
    %1388 = vmatprep.mubr.bf16.mxu0 0
    %1389 = vmatmul.mubr.bf16.gmra.mrb[0].mxu0 %v1232
    %v1390 = vpop.f32.mrb[0].mxu0
    %v1391 = vadd.f32 %v1157, %v1390
    %v1392 = vpop.f32.mrb[0].mxu0
    %v1393 = vadd.f32 %v1157, %v1392
    %v1394 = vpop.f32.mrb[0].mxu0
    %v1395 = vadd.f32 %v1162, %v1394
    %v1396 = vpop.f32.mrb[0].mxu0
    %v1397 = vadd.f32 %v1162, %v1396
    %1398 = vmatprep.mubr.bf16.mxu0 0
    %1399 = vmatmul.mubr.bf16.gmra.mrb[0].mxu0 %v1235
    %v1400 = vpop.f32.mrb[0].mxu0
    %v1401 = vadd.f32 %v1167, %v1400
    %v1402 = vpop.f32.mrb[0].mxu0
    %v1403 = vadd.f32 %v1167, %v1402
    %v1404 = vpop.f32.mrb[0].mxu0
    %v1405 = vadd.f32 %v1172, %v1404
    %v1406 = vpop.f32.mrb[0].mxu0
    %v1407 = vadd.f32 %v1172, %v1406
    %1408 = vmatprep.mubr.bf16.mxu0 0
    %1409 = vmatmul.mubr.bf16.gmra.mrb[0].mxu0 %v1238
    %v1410 = vpop.f32.mrb[0].mxu0
    %v1411 = vadd.f32 %v1177, %v1410
    %v1412 = vpop.f32.mrb[0].mxu0
    %v1413 = vadd.f32 %v1177, %v1412
    %v1414 = vpop.f32.mrb[0].mxu0
    %v1415 = vadd.f32 %v1182, %v1414
    %v1416 = vpop.f32.mrb[0].mxu0
    %v1417 = vadd.f32 %v1182, %v1416
    %1418 = vmatprep.mubr.bf16.mxu0 0
    %1419 = vmatmul.mubr.bf16.gmra.mrb[0].mxu0 %v1241
    %v1420 = vpop.f32.mrb[0].mxu0
    %v1421 = vadd.f32 %v1187, %v1420
    %v1422 = vpop.f32.mrb[0].mxu0
    %v1423 = vadd.f32 %v1187, %v1422
    %v1424 = vpop.f32.mrb[0].mxu0
    %v1425 = vadd.f32 %v1192, %v1424
    %v1426 = vpop.f32.mrb[0].mxu0
    %v1427 = vadd.f32 %v1192, %v1426
    %1428 = vdwg.mxu0
    %1429 = vmatprep.subr.bf16.mxu0 %v1111
    %1430 = vmatpush1.bf16.msra.mxu0 %v1110
    %1431 = vmatprep.subr.bf16.mxu0 %v1119
    %1432 = vmatpush1.bf16.msra.mxu0 %v1118
    %1433 = vmatprep.subr.bf16.mxu0 0
    %1434 = vmatpush1.bf16.msra.mxu0 0
    %1435 = vmatprep.subr.bf16.mxu0 0
    %1436 = vmatpush1.bf16.msra.mxu0 0
    %1437 = vmatprep.subr.bf16.mxu0 0
    %1438 = vmatpush1.bf16.msra.mxu0 0
    %1439 = vmatprep.subr.bf16.mxu0 0
    %1440 = vmatpush1.bf16.msra.mxu0 0
    %1441 = vmatprep.subr.bf16.mxu0 0
    %1442 = vmatpush1.bf16.msra.mxu0 0
    %1443 = vmatprep.subr.bf16.mxu0 0
    %1444 = vmatpush1.bf16.msra.mxu0 0
    %1445 = vmatprep.subr.bf16.mxu0 0
    %1446 = vmatpush1.bf16.msra.mxu0 0
    %1447 = vmatprep.subr.bf16.mxu0 0
    %1448 = vmatpush1.bf16.msra.mxu0 0
    %1449 = vmatprep.subr.bf16.mxu0 0
    %1450 = vmatpush1.bf16.msra.mxu0 0
    %1451 = vmatprep.subr.bf16.mxu0 0
    %1452 = vmatpush1.bf16.msra.mxu0 0
    %1453 = vmatprep.subr.bf16.mxu0 0
    %1454 = vmatpush1.bf16.msra.mxu0 0
    %1455 = vmatprep.subr.bf16.mxu0 0
    %1456 = vmatpush1.bf16.msra.mxu0 0
    %1457 = vmatprep.subr.bf16.mxu0 0
    %1458 = vmatpush1.bf16.msra.mxu0 0
    %1459 = vmatprep.subr.bf16.mxu0 0
    %1460 = vmatpush1.bf16.msra.mxu0 0
    %1461 = vmatprep.mubr.bf16.mxu0 0
    %1462 = vmatmul.mubr.bf16.gmra.mrb[0].mxu0 %v1226
    %v1463 = vpop.f32.mrb[0].mxu0
    %v1464 = vadd.f32 %v1137, %v1463
    %v1465 = vpop.f32.mrb[0].mxu0
    %v1466 = vadd.f32 %v1137, %v1465
    %v1467 = vpop.f32.mrb[0].mxu0
    %v1468 = vadd.f32 %v1142, %v1467
    %v1469 = vpop.f32.mrb[0].mxu0
    %v1470 = vadd.f32 %v1142, %v1469
    %1471 = vmatprep.mubr.bf16.mxu0 0
    %1472 = vmatmul.mubr.bf16.gmra.mrb[0].mxu0 %v1229
    %v1473 = vpop.f32.mrb[0].mxu0
    %v1474 = vadd.f32 %v1147, %v1473
    %v1475 = vpop.f32.mrb[0].mxu0
    %v1476 = vadd.f32 %v1147, %v1475
    %v1477 = vpop.f32.mrb[0].mxu0
    %v1478 = vadd.f32 %v1152, %v1477
    %v1479 = vpop.f32.mrb[0].mxu0
    %v1480 = vadd.f32 %v1152, %v1479
    %1481 = vmatprep.mubr.bf16.mxu0 0
    %1482 = vmatmul.mubr.bf16.gmra.mrb[0].mxu0 %v1232
    %v1483 = vpop.f32.mrb[0].mxu0
    %v1484 = vadd.f32 %v1157, %v1483
    %v1485 = vpop.f32.mrb[0].mxu0
    %v1486 = vadd.f32 %v1157, %v1485
    %v1487 = vpop.f32.mrb[0].mxu0
    %v1488 = vadd.f32 %v1162, %v1487
    %v1489 = vpop.f32.mrb[0].mxu0
    %v1490 = vadd.f32 %v1162, %v1489
    %1491 = vmatprep.mubr.bf16.mxu0 0
    %1492 = vmatmul.mubr.bf16.gmra.mrb[0].mxu0 %v1235
    %v1493 = vpop.f32.mrb[0].mxu0
    %v1494 = vadd.f32 %v1167, %v1493
    %v1495 = vpop.f32.mrb[0].mxu0
    %v1496 = vadd.f32 %v1167, %v1495
    %v1497 = vpop.f32.mrb[0].mxu0
    %v1498 = vadd.f32 %v1172, %v1497
    %v1499 = vpop.f32.mrb[0].mxu0
    %v1500 = vadd.f32 %v1172, %v1499
    %1501 = vmatprep.mubr.bf16.mxu0 0
    %1502 = vmatmul.mubr.bf16.gmra.mrb[0].mxu0 %v1238
    %v1503 = vpop.f32.mrb[0].mxu0
    %v1504 = vadd.f32 %v1177, %v1503
    %v1505 = vpop.f32.mrb[0].mxu0
    %v1506 = vadd.f32 %v1177, %v1505
    %v1507 = vpop.f32.mrb[0].mxu0
    %v1508 = vadd.f32 %v1182, %v1507
    %v1509 = vpop.f32.mrb[0].mxu0
    %v1510 = vadd.f32 %v1182, %v1509
    %1511 = vmatprep.mubr.bf16.mxu0 0
    %1512 = vmatmul.mubr.bf16.gmra.mrb[0].mxu0 %v1241
    %v1513 = vpop.f32.mrb[0].mxu0
    %v1514 = vadd.f32 %v1187, %v1513
    %v1515 = vpop.f32.mrb[0].mxu0
    %v1516 = vadd.f32 %v1187, %v1515
    %v1517 = vpop.f32.mrb[0].mxu0
    %v1518 = vadd.f32 %v1192, %v1517
    %v1519 = vpop.f32.mrb[0].mxu0
    %v1520 = vadd.f32 %v1192, %v1519
    %1521 = vdwg.mxu0
    %1522 = vmatprep.subr.bf16.mxu0 %v1113
    %1523 = vmatpush1.bf16.msra.mxu0 %v1112
    %1524 = vmatprep.subr.bf16.mxu0 %v1121
    %1525 = vmatpush1.bf16.msra.mxu0 %v1120
    %1526 = vmatprep.subr.bf16.mxu0 0
    %1527 = vmatpush1.bf16.msra.mxu0 0
    %1528 = vmatprep.subr.bf16.mxu0 0
    %1529 = vmatpush1.bf16.msra.mxu0 0
    %1530 = vmatprep.subr.bf16.mxu0 0
    %1531 = vmatpush1.bf16.msra.mxu0 0
    %1532 = vmatprep.subr.bf16.mxu0 0
    %1533 = vmatpush1.bf16.msra.mxu0 0
    %1534 = vmatprep.subr.bf16.mxu0 0
    %1535 = vmatpush1.bf16.msra.mxu0 0
    %1536 = vmatprep.subr.bf16.mxu0 0
    %1537 = vmatpush1.bf16.msra.mxu0 0
    %1538 = vmatprep.subr.bf16.mxu0 0
    %1539 = vmatpush1.bf16.msra.mxu0 0
    %1540 = vmatprep.subr.bf16.mxu0 0
    %1541 = vmatpush1.bf16.msra.mxu0 0
    %1542 = vmatprep.subr.bf16.mxu0 0
    %1543 = vmatpush1.bf16.msra.mxu0 0
    %1544 = vmatprep.subr.bf16.mxu0 0
    %1545 = vmatpush1.bf16.msra.mxu0 0
    %1546 = vmatprep.subr.bf16.mxu0 0
    %1547 = vmatpush1.bf16.msra.mxu0 0
    %1548 = vmatprep.subr.bf16.mxu0 0
    %1549 = vmatpush1.bf16.msra.mxu0 0
    %1550 = vmatprep.subr.bf16.mxu0 0
    %1551 = vmatpush1.bf16.msra.mxu0 0
    %1552 = vmatprep.subr.bf16.mxu0 0
    %1553 = vmatpush1.bf16.msra.mxu0 0
    %1554 = vmatprep.mubr.bf16.mxu0 0
    %1555 = vmatmul.mubr.bf16.gmra.mrb[0].mxu0 %v1226
    %v1556 = vpop.f32.mrb[0].mxu0
    %v1557 = vadd.f32 %v1137, %v1556
    %v1558 = vpop.f32.mrb[0].mxu0
    %v1559 = vadd.f32 %v1137, %v1558
    %v1560 = vpop.f32.mrb[0].mxu0
    %v1561 = vadd.f32 %v1142, %v1560
    %v1562 = vpop.f32.mrb[0].mxu0
    %v1563 = vadd.f32 %v1142, %v1562
    %1564 = vmatprep.mubr.bf16.mxu0 0
    %1565 = vmatmul.mubr.bf16.gmra.mrb[0].mxu0 %v1229
    %v1566 = vpop.f32.mrb[0].mxu0
    %v1567 = vadd.f32 %v1147, %v1566
    %v1568 = vpop.f32.mrb[0].mxu0
    %v1569 = vadd.f32 %v1147, %v1568
    %v1570 = vpop.f32.mrb[0].mxu0
    %v1571 = vadd.f32 %v1152, %v1570
    %v1572 = vpop.f32.mrb[0].mxu0
    %v1573 = vadd.f32 %v1152, %v1572
    %1574 = vmatprep.mubr.bf16.mxu0 0
    %1575 = vmatmul.mubr.bf16.gmra.mrb[0].mxu0 %v1232
    %v1576 = vpop.f32.mrb[0].mxu0
    %v1577 = vadd.f32 %v1157, %v1576
    %v1578 = vpop.f32.mrb[0].mxu0
    %v1579 = vadd.f32 %v1157, %v1578
    %v1580 = vpop.f32.mrb[0].mxu0
    %v1581 = vadd.f32 %v1162, %v1580
    %v1582 = vpop.f32.mrb[0].mxu0
    %v1583 = vadd.f32 %v1162, %v1582
    %1584 = vmatprep.mubr.bf16.mxu0 0
    %1585 = vmatmul.mubr.bf16.gmra.mrb[0].mxu0 %v1235
    %v1586 = vpop.f32.mrb[0].mxu0
    %v1587 = vadd.f32 %v1167, %v1586
    %v1588 = vpop.f32.mrb[0].mxu0
    %v1589 = vadd.f32 %v1167, %v1588
    %v1590 = vpop.f32.mrb[0].mxu0
    %v1591 = vadd.f32 %v1172, %v1590
    %v1592 = vpop.f32.mrb[0].mxu0
    %v1593 = vadd.f32 %v1172, %v1592
    %1594 = vmatprep.mubr.bf16.mxu0 0
    %1595 = vmatmul.mubr.bf16.gmra.mrb[0].mxu0 %v1238
    %v1596 = vpop.f32.mrb[0].mxu0
    %v1597 = vadd.f32 %v1177, %v1596
    %v1598 = vpop.f32.mrb[0].mxu0
    %v1599 = vadd.f32 %v1177, %v1598
    %v1600 = vpop.f32.mrb[0].mxu0
    %v1601 = vadd.f32 %v1182, %v1600
    %v1602 = vpop.f32.mrb[0].mxu0
    %v1603 = vadd.f32 %v1182, %v1602
    %1604 = vmatprep.mubr.bf16.mxu0 0
    %1605 = vmatmul.mubr.bf16.gmra.mrb[0].mxu0 %v1241
    %v1606 = vpop.f32.mrb[0].mxu0
    %v1607 = vadd.f32 %v1187, %v1606
    %v1608 = vpop.f32.mrb[0].mxu0
    %v1609 = vadd.f32 %v1187, %v1608
    %v1610 = vpop.f32.mrb[0].mxu0
    %v1611 = vadd.f32 %v1192, %v1610
    %v1612 = vpop.f32.mrb[0].mxu0
    %v1613 = vadd.f32 %v1192, %v1612
    %1614 = vdwg.mxu0
    %v1615 = vxor.u32 %v1278, 2147483648
    %v1616 = vxor.u32 %v1280, 2147483648
    %v1617 = vxor.u32 %v1371, 2147483648
    %v1618 = vxor.u32 %v1373, 2147483648
    %v1619 = vxor.u32 %v1464, 2147483648
    %v1620 = vxor.u32 %v1466, 2147483648
    %v1621 = vxor.u32 %v1557, 2147483648
    %v1622 = vxor.u32 %v1559, 2147483648
    %v1623 = vxor.u32 %v1282, 2147483648
    %v1624 = vxor.u32 %v1284, 2147483648
    %v1625 = vxor.u32 %v1375, 2147483648
    %v1626 = vxor.u32 %v1377, 2147483648
    %v1627 = vxor.u32 %v1468, 2147483648
    %v1628 = vxor.u32 %v1470, 2147483648
    %v1629 = vxor.u32 %v1561, 2147483648
    %v1630 = vxor.u32 %v1563, 2147483648
    %v1631 = vxor.u32 %v1288, 2147483648
    %v1632 = vxor.u32 %v1290, 2147483648
    %v1633 = vxor.u32 %v1381, 2147483648
    %v1634 = vxor.u32 %v1383, 2147483648
    %v1635 = vxor.u32 %v1474, 2147483648
    %v1636 = vxor.u32 %v1476, 2147483648
    %v1637 = vxor.u32 %v1567, 2147483648
    %v1638 = vxor.u32 %v1569, 2147483648
    %v1639 = vxor.u32 %v1292, 2147483648
    %v1640 = vxor.u32 %v1294, 2147483648
    %v1641 = vxor.u32 %v1385, 2147483648
    %v1642 = vxor.u32 %v1387, 2147483648
    %v1643 = vxor.u32 %v1478, 2147483648
    %v1644 = vxor.u32 %v1480, 2147483648
    %v1645 = vxor.u32 %v1571, 2147483648
    %v1646 = vxor.u32 %v1573, 2147483648
    %v1647 = vmul.f32 %v1615, 1.442695
    %v1648 = vpow.pop %v1647
    %v1649 = vmul.f32 %v1616, 1.442695
    %v1650 = vpow.pop %v1649
    %v1651 = vmul.f32 %v1617, 1.442695
    %v1652 = vpow.pop %v1651
    %v1653 = vmul.f32 %v1618, 1.442695
    %v1654 = vpow.pop %v1653
    %v1655 = vmul.f32 %v1619, 1.442695
    %v1656 = vpow.pop %v1655
    %v1657 = vmul.f32 %v1620, 1.442695
    %v1658 = vpow.pop %v1657
    %v1659 = vmul.f32 %v1621, 1.442695
    %v1660 = vpow.pop %v1659
    %v1661 = vmul.f32 %v1622, 1.442695
    %v1662 = vpow.pop %v1661
    %v1663 = vmul.f32 %v1623, 1.442695
    %v1664 = vpow.pop %v1663
    %v1665 = vmul.f32 %v1624, 1.442695
    %v1666 = vpow.pop %v1665
    %v1667 = vmul.f32 %v1625, 1.442695
    %v1668 = vpow.pop %v1667
    %v1669 = vmul.f32 %v1626, 1.442695
    %v1670 = vpow.pop %v1669
    %v1671 = vmul.f32 %v1627, 1.442695
    %v1672 = vpow.pop %v1671
    %v1673 = vmul.f32 %v1628, 1.442695
    %v1674 = vpow.pop %v1673
    %v1675 = vmul.f32 %v1629, 1.442695
    %v1676 = vpow.pop %v1675
    %v1677 = vmul.f32 %v1630, 1.442695
    %v1678 = vpow.pop %v1677
    %v1679 = vmul.f32 %v1631, 1.442695
    %v1680 = vpow.pop %v1679
    %v1681 = vmul.f32 %v1632, 1.442695
    %v1682 = vpow.pop %v1681
    %v1683 = vmul.f32 %v1633, 1.442695
    %v1684 = vpow.pop %v1683
    %v1685 = vmul.f32 %v1634, 1.442695
    %v1686 = vpow.pop %v1685
    %v1687 = vmul.f32 %v1635, 1.442695
    %v1688 = vpow.pop %v1687
    %v1689 = vmul.f32 %v1636, 1.442695
    %v1690 = vpow.pop %v1689
    %v1691 = vmul.f32 %v1637, 1.442695
    %v1692 = vpow.pop %v1691
    %v1693 = vmul.f32 %v1638, 1.442695
    %v1694 = vpow.pop %v1693
    %v1695 = vmul.f32 %v1639, 1.442695
    %v1696 = vpow.pop %v1695
    %v1697 = vmul.f32 %v1640, 1.442695
    %v1698 = vpow.pop %v1697
    %v1699 = vmul.f32 %v1641, 1.442695
    %v1700 = vpow.pop %v1699
    %v1701 = vmul.f32 %v1642, 1.442695
    %v1702 = vpow.pop %v1701
    %v1703 = vmul.f32 %v1643, 1.442695
    %v1704 = vpow.pop %v1703
    %v1705 = vmul.f32 %v1644, 1.442695
    %v1706 = vpow.pop %v1705
    %v1707 = vmul.f32 %v1645, 1.442695
    %v1708 = vpow.pop %v1707
    %v1709 = vmul.f32 %v1646, 1.442695
    %v1710 = vpow.pop %v1709
    %v1711 = vadd.f32 %v1648, 1.0
    %v1712 = vadd.f32 %v1650, 1.0
    %v1713 = vadd.f32 %v1652, 1.0
    %v1714 = vadd.f32 %v1654, 1.0
    %v1715 = vadd.f32 %v1656, 1.0
    %v1716 = vadd.f32 %v1658, 1.0
    %v1717 = vadd.f32 %v1660, 1.0
    %v1718 = vadd.f32 %v1662, 1.0
    %v1719 = vadd.f32 %v1664, 1.0
    %v1720 = vadd.f32 %v1666, 1.0
    %v1721 = vadd.f32 %v1668, 1.0
    %v1722 = vadd.f32 %v1670, 1.0
    %v1723 = vadd.f32 %v1672, 1.0
    %v1724 = vadd.f32 %v1674, 1.0
    %v1725 = vadd.f32 %v1676, 1.0
    %v1726 = vadd.f32 %v1678, 1.0
    %v1727 = vadd.f32 %v1680, 1.0
    %v1728 = vadd.f32 %v1682, 1.0
    %v1729 = vadd.f32 %v1684, 1.0
    %v1730 = vadd.f32 %v1686, 1.0
    %v1731 = vadd.f32 %v1688, 1.0
    %v1732 = vadd.f32 %v1690, 1.0
    %v1733 = vadd.f32 %v1692, 1.0
    %v1734 = vadd.f32 %v1694, 1.0
    %v1735 = vadd.f32 %v1696, 1.0
    %v1736 = vadd.f32 %v1698, 1.0
    %v1737 = vadd.f32 %v1700, 1.0
    %v1738 = vadd.f32 %v1702, 1.0
    %v1739 = vadd.f32 %v1704, 1.0
    %v1740 = vadd.f32 %v1706, 1.0
    %v1741 = vadd.f32 %v1708, 1.0
    %v1742 = vadd.f32 %v1710, 1.0
    %v1743 = vrcp.pop %v1711
    %v1744 = vmul.f32 1.0, %v1743
    %v1745 = vrcp.pop %v1712
    %v1746 = vmul.f32 1.0, %v1745
    %v1747 = vrcp.pop %v1713
    %v1748 = vmul.f32 1.0, %v1747
    %v1749 = vrcp.pop %v1714
    %v1750 = vmul.f32 1.0, %v1749
    %v1751 = vrcp.pop %v1715
    %v1752 = vmul.f32 1.0, %v1751
    %v1753 = vrcp.pop %v1716
    %v1754 = vmul.f32 1.0, %v1753
    %v1755 = vrcp.pop %v1717
    %v1756 = vmul.f32 1.0, %v1755
    %v1757 = vrcp.pop %v1718
    %v1758 = vmul.f32 1.0, %v1757
    %v1759 = vrcp.pop %v1719
    %v1760 = vmul.f32 1.0, %v1759
    %v1761 = vrcp.pop %v1720
    %v1762 = vmul.f32 1.0, %v1761
    %v1763 = vrcp.pop %v1721
    %v1764 = vmul.f32 1.0, %v1763
    %v1765 = vrcp.pop %v1722
    %v1766 = vmul.f32 1.0, %v1765
    %v1767 = vrcp.pop %v1723
    %v1768 = vmul.f32 1.0, %v1767
    %v1769 = vrcp.pop %v1724
    %v1770 = vmul.f32 1.0, %v1769
    %v1771 = vrcp.pop %v1725
    %v1772 = vmul.f32 1.0, %v1771
    %v1773 = vrcp.pop %v1726
    %v1774 = vmul.f32 1.0, %v1773
    %v1775 = vrcp.pop %v1727
    %v1776 = vmul.f32 1.0, %v1775
    %v1777 = vrcp.pop %v1728
    %v1778 = vmul.f32 1.0, %v1777
    %v1779 = vrcp.pop %v1729
    %v1780 = vmul.f32 1.0, %v1779
    %v1781 = vrcp.pop %v1730
    %v1782 = vmul.f32 1.0, %v1781
    %v1783 = vrcp.pop %v1731
    %v1784 = vmul.f32 1.0, %v1783
    %v1785 = vrcp.pop %v1732
    %v1786 = vmul.f32 1.0, %v1785
    %v1787 = vrcp.pop %v1733
    %v1788 = vmul.f32 1.0, %v1787
    %v1789 = vrcp.pop %v1734
    %v1790 = vmul.f32 1.0, %v1789
    %v1791 = vrcp.pop %v1735
    %v1792 = vmul.f32 1.0, %v1791
    %v1793 = vrcp.pop %v1736
    %v1794 = vmul.f32 1.0, %v1793
    %v1795 = vrcp.pop %v1737
    %v1796 = vmul.f32 1.0, %v1795
    %v1797 = vrcp.pop %v1738
    %v1798 = vmul.f32 1.0, %v1797
    %v1799 = vrcp.pop %v1739
    %v1800 = vmul.f32 1.0, %v1799
    %v1801 = vrcp.pop %v1740
    %v1802 = vmul.f32 1.0, %v1801
    %v1803 = vrcp.pop %v1741
    %v1804 = vmul.f32 1.0, %v1803
    %v1805 = vrcp.pop %v1742
    %v1806 = vmul.f32 1.0, %v1805
    %v1807 = vtanh.pop %v1298
    %v1808 = vtanh.pop %v1300
    %v1809 = vtanh.pop %v1391
    %v1810 = vtanh.pop %v1393
    %v1811 = vtanh.pop %v1484
    %v1812 = vtanh.pop %v1486
    %v1813 = vtanh.pop %v1577
    %v1814 = vtanh.pop %v1579
    %v1815 = vtanh.pop %v1302
    %v1816 = vtanh.pop %v1304
    %v1817 = vtanh.pop %v1395
    %v1818 = vtanh.pop %v1397
    %v1819 = vtanh.pop %v1488
    %v1820 = vtanh.pop %v1490
    %v1821 = vtanh.pop %v1581
    %v1822 = vtanh.pop %v1583
    %v1823 = vtanh.pop %v1308
    %v1824 = vtanh.pop %v1310
    %v1825 = vtanh.pop %v1401
    %v1826 = vtanh.pop %v1403
    %v1827 = vtanh.pop %v1494
    %v1828 = vtanh.pop %v1496
    %v1829 = vtanh.pop %v1587
    %v1830 = vtanh.pop %v1589
    %v1831 = vtanh.pop %v1312
    %v1832 = vtanh.pop %v1314
    %v1833 = vtanh.pop %v1405
    %v1834 = vtanh.pop %v1407
    %v1835 = vtanh.pop %v1498
    %v1836 = vtanh.pop %v1500
    %v1837 = vtanh.pop %v1591
    %v1838 = vtanh.pop %v1593
    %v1839 = vxor.u32 %v1318, 2147483648
    %v1840 = vxor.u32 %v1320, 2147483648
    %v1841 = vxor.u32 %v1411, 2147483648
    %v1842 = vxor.u32 %v1413, 2147483648
    %v1843 = vxor.u32 %v1504, 2147483648
    %v1844 = vxor.u32 %v1506, 2147483648
    %v1845 = vxor.u32 %v1597, 2147483648
    %v1846 = vxor.u32 %v1599, 2147483648
    %v1847 = vxor.u32 %v1322, 2147483648
    %v1848 = vxor.u32 %v1324, 2147483648
    %v1849 = vxor.u32 %v1415, 2147483648
    %v1850 = vxor.u32 %v1417, 2147483648
    %v1851 = vxor.u32 %v1508, 2147483648
    %v1852 = vxor.u32 %v1510, 2147483648
    %v1853 = vxor.u32 %v1601, 2147483648
    %v1854 = vxor.u32 %v1603, 2147483648
    %v1855 = vxor.u32 %v1328, 2147483648
    %v1856 = vxor.u32 %v1330, 2147483648
    %v1857 = vxor.u32 %v1421, 2147483648
    %v1858 = vxor.u32 %v1423, 2147483648
    %v1859 = vxor.u32 %v1514, 2147483648
    %v1860 = vxor.u32 %v1516, 2147483648
    %v1861 = vxor.u32 %v1607, 2147483648
    %v1862 = vxor.u32 %v1609, 2147483648
    %v1863 = vxor.u32 %v1332, 2147483648
    %v1864 = vxor.u32 %v1334, 2147483648
    %v1865 = vxor.u32 %v1425, 2147483648
    %v1866 = vxor.u32 %v1427, 2147483648
    %v1867 = vxor.u32 %v1518, 2147483648
    %v1868 = vxor.u32 %v1520, 2147483648
    %v1869 = vxor.u32 %v1611, 2147483648
    %v1870 = vxor.u32 %v1613, 2147483648
    %v1871 = vmul.f32 %v1839, 1.442695
    %v1872 = vpow.pop %v1871
    %v1873 = vmul.f32 %v1840, 1.442695
    %v1874 = vpow.pop %v1873
    %v1875 = vmul.f32 %v1841, 1.442695
    %v1876 = vpow.pop %v1875
    %v1877 = vmul.f32 %v1842, 1.442695
    %v1878 = vpow.pop %v1877
    %v1879 = vmul.f32 %v1843, 1.442695
    %v1880 = vpow.pop %v1879
    %v1881 = vmul.f32 %v1844, 1.442695
    %v1882 = vpow.pop %v1881
    %v1883 = vmul.f32 %v1845, 1.442695
    %v1884 = vpow.pop %v1883
    %v1885 = vmul.f32 %v1846, 1.442695
    %v1886 = vpow.pop %v1885
    %v1887 = vmul.f32 %v1847, 1.442695
    %v1888 = vpow.pop %v1887
    %v1889 = vmul.f32 %v1848, 1.442695
    %v1890 = vpow.pop %v1889
    %v1891 = vmul.f32 %v1849, 1.442695
    %v1892 = vpow.pop %v1891
    %v1893 = vmul.f32 %v1850, 1.442695
    %v1894 = vpow.pop %v1893
    %v1895 = vmul.f32 %v1851, 1.442695
    %v1896 = vpow.pop %v1895
    %v1897 = vmul.f32 %v1852, 1.442695
    %v1898 = vpow.pop %v1897
    %v1899 = vmul.f32 %v1853, 1.442695
    %v1900 = vpow.pop %v1899
    %v1901 = vmul.f32 %v1854, 1.442695
    %v1902 = vpow.pop %v1901
    %v1903 = vmul.f32 %v1855, 1.442695
    %v1904 = vpow.pop %v1903
    %v1905 = vmul.f32 %v1856, 1.442695
    %v1906 = vpow.pop %v1905
    %v1907 = vmul.f32 %v1857, 1.442695
    %v1908 = vpow.pop %v1907
    %v1909 = vmul.f32 %v1858, 1.442695
    %v1910 = vpow.pop %v1909
    %v1911 = vmul.f32 %v1859, 1.442695
    %v1912 = vpow.pop %v1911
    %v1913 = vmul.f32 %v1860, 1.442695
    %v1914 = vpow.pop %v1913
    %v1915 = vmul.f32 %v1861, 1.442695
    %v1916 = vpow.pop %v1915
    %v1917 = vmul.f32 %v1862, 1.442695
    %v1918 = vpow.pop %v1917
    %v1919 = vmul.f32 %v1863, 1.442695
    %v1920 = vpow.pop %v1919
    %v1921 = vmul.f32 %v1864, 1.442695
    %v1922 = vpow.pop %v1921
    %v1923 = vmul.f32 %v1865, 1.442695
    %v1924 = vpow.pop %v1923
    %v1925 = vmul.f32 %v1866, 1.442695
    %v1926 = vpow.pop %v1925
    %v1927 = vmul.f32 %v1867, 1.442695
    %v1928 = vpow.pop %v1927
    %v1929 = vmul.f32 %v1868, 1.442695
    %v1930 = vpow.pop %v1929
    %v1931 = vmul.f32 %v1869, 1.442695
    %v1932 = vpow.pop %v1931
    %v1933 = vmul.f32 %v1870, 1.442695
    %v1934 = vpow.pop %v1933
    %v1935 = vadd.f32 %v1872, 1.0
    %v1936 = vadd.f32 %v1874, 1.0
    %v1937 = vadd.f32 %v1876, 1.0
    %v1938 = vadd.f32 %v1878, 1.0
    %v1939 = vadd.f32 %v1880, 1.0
    %v1940 = vadd.f32 %v1882, 1.0
    %v1941 = vadd.f32 %v1884, 1.0
    %v1942 = vadd.f32 %v1886, 1.0
    %v1943 = vadd.f32 %v1888, 1.0
    %v1944 = vadd.f32 %v1890, 1.0
    %v1945 = vadd.f32 %v1892, 1.0
    %v1946 = vadd.f32 %v1894, 1.0
    %v1947 = vadd.f32 %v1896, 1.0
    %v1948 = vadd.f32 %v1898, 1.0
    %v1949 = vadd.f32 %v1900, 1.0
    %v1950 = vadd.f32 %v1902, 1.0
    %v1951 = vadd.f32 %v1904, 1.0
    %v1952 = vadd.f32 %v1906, 1.0
    %v1953 = vadd.f32 %v1908, 1.0
    %v1954 = vadd.f32 %v1910, 1.0
    %v1955 = vadd.f32 %v1912, 1.0
    %v1956 = vadd.f32 %v1914, 1.0
    %v1957 = vadd.f32 %v1916, 1.0
    %v1958 = vadd.f32 %v1918, 1.0
    %v1959 = vadd.f32 %v1920, 1.0
    %v1960 = vadd.f32 %v1922, 1.0
    %v1961 = vadd.f32 %v1924, 1.0
    %v1962 = vadd.f32 %v1926, 1.0
    %v1963 = vadd.f32 %v1928, 1.0
    %v1964 = vadd.f32 %v1930, 1.0
    %v1965 = vadd.f32 %v1932, 1.0
    %v1966 = vadd.f32 %v1934, 1.0
    %v1967 = vrcp.pop %v1935
    %v1968 = vmul.f32 1.0, %v1967
    %v1969 = vrcp.pop %v1936
    %v1970 = vmul.f32 1.0, %v1969
    %v1971 = vrcp.pop %v1937
    %v1972 = vmul.f32 1.0, %v1971
    %v1973 = vrcp.pop %v1938
    %v1974 = vmul.f32 1.0, %v1973
    %v1975 = vrcp.pop %v1939
    %v1976 = vmul.f32 1.0, %v1975
    %v1977 = vrcp.pop %v1940
    %v1978 = vmul.f32 1.0, %v1977
    %v1979 = vrcp.pop %v1941
    %v1980 = vmul.f32 1.0, %v1979
    %v1981 = vrcp.pop %v1942
    %v1982 = vmul.f32 1.0, %v1981
    %v1983 = vrcp.pop %v1943
    %v1984 = vmul.f32 1.0, %v1983
    %v1985 = vrcp.pop %v1944
    %v1986 = vmul.f32 1.0, %v1985
    %v1987 = vrcp.pop %v1945
    %v1988 = vmul.f32 1.0, %v1987
    %v1989 = vrcp.pop %v1946
    %v1990 = vmul.f32 1.0, %v1989
    %v1991 = vrcp.pop %v1947
    %v1992 = vmul.f32 1.0, %v1991
    %v1993 = vrcp.pop %v1948
    %v1994 = vmul.f32 1.0, %v1993
    %v1995 = vrcp.pop %v1949
    %v1996 = vmul.f32 1.0, %v1995
    %v1997 = vrcp.pop %v1950
    %v1998 = vmul.f32 1.0, %v1997
    %v1999 = vrcp.pop %v1951
    %v2000 = vmul.f32 1.0, %v1999
    %v2001 = vrcp.pop %v1952
    %v2002 = vmul.f32 1.0, %v2001
    %v2003 = vrcp.pop %v1953
    %v2004 = vmul.f32 1.0, %v2003
    %v2005 = vrcp.pop %v1954
    %v2006 = vmul.f32 1.0, %v2005
    %v2007 = vrcp.pop %v1955
    %v2008 = vmul.f32 1.0, %v2007
    %v2009 = vrcp.pop %v1956
    %v2010 = vmul.f32 1.0, %v2009
    %v2011 = vrcp.pop %v1957
    %v2012 = vmul.f32 1.0, %v2011
    %v2013 = vrcp.pop %v1958
    %v2014 = vmul.f32 1.0, %v2013
    %v2015 = vrcp.pop %v1959
    %v2016 = vmul.f32 1.0, %v2015
    %v2017 = vrcp.pop %v1960
    %v2018 = vmul.f32 1.0, %v2017
    %v2019 = vrcp.pop %v1961
    %v2020 = vmul.f32 1.0, %v2019
    %v2021 = vrcp.pop %v1962
    %v2022 = vmul.f32 1.0, %v2021
    %v2023 = vrcp.pop %v1963
    %v2024 = vmul.f32 1.0, %v2023
    %v2025 = vrcp.pop %v1964
    %v2026 = vmul.f32 1.0, %v2025
    %v2027 = vrcp.pop %v1965
    %v2028 = vmul.f32 1.0, %v2027
    %v2029 = vrcp.pop %v1966
    %v2030 = vmul.f32 1.0, %v2029
    %v2031 = vmul.f32 %v1744, %v1807
    %v2032 = vmul.f32 %v1746, %v1808
    %v2033 = vmul.f32 %v1748, %v1809
    %v2034 = vmul.f32 %v1750, %v1810
    %v2035 = vmul.f32 %v1752, %v1811
    %v2036 = vmul.f32 %v1754, %v1812
    %v2037 = vmul.f32 %v1756, %v1813
    %v2038 = vmul.f32 %v1758, %v1814
    %v2039 = vmul.f32 %v1760, %v1815
    %v2040 = vmul.f32 %v1762, %v1816
    %v2041 = vmul.f32 %v1764, %v1817
    %v2042 = vmul.f32 %v1766, %v1818
    %v2043 = vmul.f32 %v1768, %v1819
    %v2044 = vmul.f32 %v1770, %v1820
    %v2045 = vmul.f32 %v1772, %v1821
    %v2046 = vmul.f32 %v1774, %v1822
    %v2047 = vmul.f32 %v1776, %v1823
    %v2048 = vmul.f32 %v1778, %v1824
    %v2049 = vmul.f32 %v1780, %v1825
    %v2050 = vmul.f32 %v1782, %v1826
    %v2051 = vmul.f32 %v1784, %v1827
    %v2052 = vmul.f32 %v1786, %v1828
    %v2053 = vmul.f32 %v1788, %v1829
    %v2054 = vmul.f32 %v1790, %v1830
    %v2055 = vmul.f32 %v1792, %v1831
    %v2056 = vmul.f32 %v1794, %v1832
    %v2057 = vmul.f32 %v1796, %v1833
    %v2058 = vmul.f32 %v1798, %v1834
    %v2059 = vmul.f32 %v1800, %v1835
    %v2060 = vmul.f32 %v1802, %v1836
    %v2061 = vmul.f32 %v1804, %v1837
    %v2062 = vmul.f32 %v1806, %v1838
    %v2063 = vtanh.pop %v2031
    %v2064 = vtanh.pop %v2032
    %v2065 = vtanh.pop %v2033
    %v2066 = vtanh.pop %v2034
    %v2067 = vtanh.pop %v2035
    %v2068 = vtanh.pop %v2036
    %v2069 = vtanh.pop %v2037
    %v2070 = vtanh.pop %v2038
    %v2071 = vtanh.pop %v2039
    %v2072 = vtanh.pop %v2040
    %v2073 = vtanh.pop %v2041
    %v2074 = vtanh.pop %v2042
    %v2075 = vtanh.pop %v2043
    %v2076 = vtanh.pop %v2044
    %v2077 = vtanh.pop %v2045
    %v2078 = vtanh.pop %v2046
    %v2079 = vtanh.pop %v2047
    %v2080 = vtanh.pop %v2048
    %v2081 = vtanh.pop %v2049
    %v2082 = vtanh.pop %v2050
    %v2083 = vtanh.pop %v2051
    %v2084 = vtanh.pop %v2052
    %v2085 = vtanh.pop %v2053
    %v2086 = vtanh.pop %v2054
    %v2087 = vtanh.pop %v2055
    %v2088 = vtanh.pop %v2056
    %v2089 = vtanh.pop %v2057
    %v2090 = vtanh.pop %v2058
    %v2091 = vtanh.pop %v2059
    %v2092 = vtanh.pop %v2060
    %v2093 = vtanh.pop %v2061
    %v2094 = vtanh.pop %v2062
    %v2095 = vmul.f32 %v1968, %v2063
    %v2096 = vmul.f32 %v1970, %v2064
    %v2097 = vmul.f32 %v1972, %v2065
    %v2098 = vmul.f32 %v1974, %v2066
    %v2099 = vmul.f32 %v1976, %v2067
    %v2100 = vmul.f32 %v1978, %v2068
    %v2101 = vmul.f32 %v1980, %v2069
    %v2102 = vmul.f32 %v1982, %v2070
    %v2103 = vmul.f32 %v1984, %v2071
    %v2104 = vmul.f32 %v1986, %v2072
    %v2105 = vmul.f32 %v1988, %v2073
    %v2106 = vmul.f32 %v1990, %v2074
    %v2107 = vmul.f32 %v1992, %v2075
    %v2108 = vmul.f32 %v1994, %v2076
    %v2109 = vmul.f32 %v1996, %v2077
    %v2110 = vmul.f32 %v1998, %v2078
    %v2111 = vmul.f32 %v2000, %v2079
    %v2112 = vmul.f32 %v2002, %v2080
    %v2113 = vmul.f32 %v2004, %v2081
    %v2114 = vmul.f32 %v2006, %v2082
    %v2115 = vmul.f32 %v2008, %v2083
    %v2116 = vmul.f32 %v2010, %v2084
    %v2117 = vmul.f32 %v2012, %v2085
    %v2118 = vmul.f32 %v2014, %v2086
    %v2119 = vmul.f32 %v2016, %v2087
    %v2120 = vmul.f32 %v2018, %v2088
    %v2121 = vmul.f32 %v2020, %v2089
    %v2122 = vmul.f32 %v2022, %v2090
    %v2123 = vmul.f32 %v2024, %v2091
    %v2124 = vmul.f32 %v2026, %v2092
    %v2125 = vmul.f32 %v2028, %v2093
    %v2126 = vmul.f32 %v2030, %v2094
    %2127 = vst [vmem:[#allocation2] sm:$0xff] %v2095
    %2128 = vst [vmem:[#allocation2 + $0x8] sm:$0xff] %v2096
    %2129 = vst [vmem:[#allocation2 + $0x10] sm:$0xff] %v2097
    %2130 = vst [vmem:[#allocation2 + $0x18] sm:$0xff] %v2098
    %2131 = vst [vmem:[#allocation2 + $0x20] sm:$0xff] %v2099
    %2132 = vst [vmem:[#allocation2 + $0x28] sm:$0xff] %v2100
    %2133 = vst [vmem:[#allocation2 + $0x30] sm:$0xff] %v2101
    %2134 = vst [vmem:[#allocation2 + $0x38] sm:$0xff] %v2102
    %2135 = vst [vmem:[#allocation2 + $0x40] sm:$0xff] %v2103
    %2136 = vst [vmem:[#allocation2 + $0x48] sm:$0xff] %v2104
    %2137 = vst [vmem:[#allocation2 + $0x50] sm:$0xff] %v2105
    %2138 = vst [vmem:[#allocation2 + $0x58] sm:$0xff] %v2106
    %2139 = vst [vmem:[#allocation2 + $0x60] sm:$0xff] %v2107
    %2140 = vst [vmem:[#allocation2 + $0x68] sm:$0xff] %v2108
    %2141 = vst [vmem:[#allocation2 + $0x70] sm:$0xff] %v2109
    %2142 = vst [vmem:[#allocation2 + $0x78] sm:$0xff] %v2110
    %2143 = vst [vmem:[#allocation2 + $0x80] sm:$0xff] %v2111
    %2144 = vst [vmem:[#allocation2 + $0x88] sm:$0xff] %v2112
    %2145 = vst [vmem:[#allocation2 + $0x90] sm:$0xff] %v2113
    %2146 = vst [vmem:[#allocation2 + $0x98] sm:$0xff] %v2114
    %2147 = vst [vmem:[#allocation2 + $0xa0] sm:$0xff] %v2115
    %2148 = vst [vmem:[#allocation2 + $0xa8] sm:$0xff] %v2116
    %2149 = vst [vmem:[#allocation2 + $0xb0] sm:$0xff] %v2117
    %2150 = vst [vmem:[#allocation2 + $0xb8] sm:$0xff] %v2118
    %2151 = vst [vmem:[#allocation2 + $0xc0] sm:$0xff] %v2119
    %2152 = vst [vmem:[#allocation2 + $0xc8] sm:$0xff] %v2120
    %2153 = vst [vmem:[#allocation2 + $0xd0] sm:$0xff] %v2121
    %2154 = vst [vmem:[#allocation2 + $0xd8] sm:$0xff] %v2122
    %2155 = vst [vmem:[#allocation2 + $0xe0] sm:$0xff] %v2123
    %2156 = vst [vmem:[#allocation2 + $0xe8] sm:$0xff] %v2124
    %2157 = vst [vmem:[#allocation2 + $0xf0] sm:$0xff] %v2125
    %2158 = vst [vmem:[#allocation2 + $0xf8] sm:$0xff] %v2126
    %v2159 = vlaneseq
    %v2160 = vand.u32 %v2159, 127
    %v2161 = vadd.s32 %v2160, 128
    %v2162 = vadd.s32 %v2160, 256
    %v2163 = vadd.s32 %v2160, 384
    %v2164 = vadd.s32 %v2160, 512
    %v2165 = vadd.s32 %v2160, 640
    %v2166 = vadd.s32 %v2160, 768
    %v2167 = vadd.s32 %v2160, 896
    %s2168 = smul.u32 0, 1024
    %v2169 = vstv %s2168
    %v2170 = vadd.s32 %v2169, %v2160
    %v2171 = vadd.s32 %v2169, %v2161
    %v2172 = vadd.s32 %v2169, %v2162
    %v2173 = vadd.s32 %v2169, %v2163
    %v2174 = vadd.s32 %v2169, %v2164
    %v2175 = vadd.s32 %v2169, %v2165
    %v2176 = vadd.s32 %v2169, %v2166
    %v2177 = vadd.s32 %v2169, %v2167
    %vm2178 = vcmp.lt.s32.totalorder %v2170, 8
    %vm2179 = vcmp.lt.s32.totalorder %v2171, 8
    %vm2180 = vcmp.lt.s32.totalorder %v2172, 8
    %vm2181 = vcmp.lt.s32.totalorder %v2173, 8
    %vm2182 = vcmp.lt.s32.totalorder %v2174, 8
    %vm2183 = vcmp.lt.s32.totalorder %v2175, 8
    %vm2184 = vcmp.lt.s32.totalorder %v2176, 8
    %vm2185 = vcmp.lt.s32.totalorder %v2177, 8
    %v2186 = vsel %vm2178, %v2095, 0.0
    %v2187 = vsel %vm2179, %v2096, 0.0
    %v2188 = vsel %vm2180, %v2097, 0.0
    %v2189 = vsel %vm2181, %v2098, 0.0
    %v2190 = vsel %vm2182, %v2099, 0.0
    %v2191 = vsel %vm2183, %v2100, 0.0
    %v2192 = vsel %vm2184, %v2101, 0.0
    %v2193 = vsel %vm2185, %v2102, 0.0
    %v2194 = vsel %vm2178, %v2103, 0.0
    %v2195 = vsel %vm2179, %v2104, 0.0
    %v2196 = vsel %vm2180, %v2105, 0.0
    %v2197 = vsel %vm2181, %v2106, 0.0
    %v2198 = vsel %vm2182, %v2107, 0.0
    %v2199 = vsel %vm2183, %v2108, 0.0
    %v2200 = vsel %vm2184, %v2109, 0.0
    %v2201 = vsel %vm2185, %v2110, 0.0
    %v2202 = vsel %vm2178, %v2111, 0.0
    %v2203 = vsel %vm2179, %v2112, 0.0
    %v2204 = vsel %vm2180, %v2113, 0.0
    %v2205 = vsel %vm2181, %v2114, 0.0
    %v2206 = vsel %vm2182, %v2115, 0.0
    %v2207 = vsel %vm2183, %v2116, 0.0
    %v2208 = vsel %vm2184, %v2117, 0.0
    %v2209 = vsel %vm2185, %v2118, 0.0
    %v2210 = vsel %vm2178, %v2119, 0.0
    %v2211 = vsel %vm2179, %v2120, 0.0
    %v2212 = vsel %vm2180, %v2121, 0.0
    %v2213 = vsel %vm2181, %v2122, 0.0
    %v2214 = vsel %vm2182, %v2123, 0.0
    %v2215 = vsel %vm2183, %v2124, 0.0
    %v2216 = vsel %vm2184, %v2125, 0.0
    %v2217 = vsel %vm2185, %v2126, 0.0
    %v2218 = vadd.f32 %v2186, %v2187
    %v2219 = vadd.f32 %v2218, %v2188
    %v2220 = vadd.f32 %v2219, %v2189
    %v2221 = vadd.f32 %v2220, %v2190
    %v2222 = vadd.f32 %v2221, %v2191
    %v2223 = vadd.f32 %v2222, %v2192
    %v2224 = vadd.f32 %v2223, %v2193
    %2225 = vadd.xlane.f32.xlu0 %v2224
    %v2226 = vpop.xlane.xlu0 %2225
    %v2227 = vadd.f32 %v2194, %v2195
    %v2228 = vadd.f32 %v2227, %v2196
    %v2229 = vadd.f32 %v2228, %v2197
    %v2230 = vadd.f32 %v2229, %v2198
    %v2231 = vadd.f32 %v2230, %v2199
    %v2232 = vadd.f32 %v2231, %v2200
    %v2233 = vadd.f32 %v2232, %v2201
    %2234 = vadd.xlane.f32.xlu0 %v2233
    %v2235 = vpop.xlane.xlu0 %2234
    %v2236 = vadd.f32 %v2202, %v2203
    %v2237 = vadd.f32 %v2236, %v2204
    %v2238 = vadd.f32 %v2237, %v2205
    %v2239 = vadd.f32 %v2238, %v2206
    %v2240 = vadd.f32 %v2239, %v2207
    %v2241 = vadd.f32 %v2240, %v2208
    %v2242 = vadd.f32 %v2241, %v2209
    %2243 = vadd.xlane.f32.xlu0 %v2242
    %v2244 = vpop.xlane.xlu0 %2243
    %v2245 = vadd.f32 %v2210, %v2211
    %v2246 = vadd.f32 %v2245, %v2212
    %v2247 = vadd.f32 %v2246, %v2213
    %v2248 = vadd.f32 %v2247, %v2214
    %v2249 = vadd.f32 %v2248, %v2215
    %v2250 = vadd.f32 %v2249, %v2216
    %v2251 = vadd.f32 %v2250, %v2217
    %2252 = vadd.xlane.f32.xlu0 %v2251
    %v2253 = vpop.xlane.xlu0 %2252
    %vm2254 = vcmask 7168
    %2255 = vst.msk [vmem:[%s6] sm:$0xff] %vm2254, %v2226
    %2256 = vst.msk [vmem:[%s6 + $0x8] sm:$0xff] %vm2254, %v2235
    %2257 = vst.msk [vmem:[%s6 + $0x10] sm:$0xff] %vm2254, %v2244
    %2258 = vst.msk [vmem:[%s6 + $0x18] sm:$0xff] %vm2254, %v2253
    %v2259 = vmul.f32 %v2186, %v2186
    %v2260 = vmul.f32 %v2187, %v2187
    %v2261 = vmul.f32 %v2188, %v2188
    %v2262 = vmul.f32 %v2189, %v2189
    %v2263 = vmul.f32 %v2190, %v2190
    %v2264 = vmul.f32 %v2191, %v2191
    %v2265 = vmul.f32 %v2192, %v2192
    %v2266 = vmul.f32 %v2193, %v2193
    %v2267 = vmul.f32 %v2194, %v2194
    %v2268 = vmul.f32 %v2195, %v2195
    %v2269 = vmul.f32 %v2196, %v2196
    %v2270 = vmul.f32 %v2197, %v2197
    %v2271 = vmul.f32 %v2198, %v2198
    %v2272 = vmul.f32 %v2199, %v2199
    %v2273 = vmul.f32 %v2200, %v2200
    %v2274 = vmul.f32 %v2201, %v2201
    %v2275 = vmul.f32 %v2202, %v2202
    %v2276 = vmul.f32 %v2203, %v2203
    %v2277 = vmul.f32 %v2204, %v2204
    %v2278 = vmul.f32 %v2205, %v2205
    %v2279 = vmul.f32 %v2206, %v2206
    %v2280 = vmul.f32 %v2207, %v2207
    %v2281 = vmul.f32 %v2208, %v2208
    %v2282 = vmul.f32 %v2209, %v2209
    %v2283 = vmul.f32 %v2210, %v2210
    %v2284 = vmul.f32 %v2211, %v2211
    %v2285 = vmul.f32 %v2212, %v2212
    %v2286 = vmul.f32 %v2213, %v2213
    %v2287 = vmul.f32 %v2214, %v2214
    %v2288 = vmul.f32 %v2215, %v2215
    %v2289 = vmul.f32 %v2216, %v2216
    %v2290 = vmul.f32 %v2217, %v2217
    %v2291 = vadd.f32 %v2259, %v2260
    %v2292 = vadd.f32 %v2291, %v2261
    %v2293 = vadd.f32 %v2292, %v2262
    %v2294 = vadd.f32 %v2293, %v2263
    %v2295 = vadd.f32 %v2294, %v2264
    %v2296 = vadd.f32 %v2295, %v2265
    %v2297 = vadd.f32 %v2296, %v2266
    %2298 = vadd.xlane.f32.xlu0 %v2297
    %v2299 = vpop.xlane.xlu0 %2298
    %v2300 = vadd.f32 %v2267, %v2268
    %v2301 = vadd.f32 %v2300, %v2269
    %v2302 = vadd.f32 %v2301, %v2270
    %v2303 = vadd.f32 %v2302, %v2271
    %v2304 = vadd.f32 %v2303, %v2272
    %v2305 = vadd.f32 %v2304, %v2273
    %v2306 = vadd.f32 %v2305, %v2274
    %2307 = vadd.xlane.f32.xlu0 %v2306
    %v2308 = vpop.xlane.xlu0 %2307
    %v2309 = vadd.f32 %v2275, %v2276
    %v2310 = vadd.f32 %v2309, %v2277
    %v2311 = vadd.f32 %v2310, %v2278
    %v2312 = vadd.f32 %v2311, %v2279
    %v2313 = vadd.f32 %v2312, %v2280
    %v2314 = vadd.f32 %v2313, %v2281
    %v2315 = vadd.f32 %v2314, %v2282
    %2316 = vadd.xlane.f32.xlu0 %v2315
    %v2317 = vpop.xlane.xlu0 %2316
    %v2318 = vadd.f32 %v2283, %v2284
    %v2319 = vadd.f32 %v2318, %v2285
    %v2320 = vadd.f32 %v2319, %v2286
    %v2321 = vadd.f32 %v2320, %v2287
    %v2322 = vadd.f32 %v2321, %v2288
    %v2323 = vadd.f32 %v2322, %v2289
    %v2324 = vadd.f32 %v2323, %v2290
    %2325 = vadd.xlane.f32.xlu0 %v2324
    %v2326 = vpop.xlane.xlu0 %2325
    %2327 = vst.msk [vmem:[%s7] sm:$0xff] %vm2254, %v2299
    %2328 = vst.msk [vmem:[%s7 + $0x8] sm:$0xff] %vm2254, %v2308
    %2329 = vst.msk [vmem:[%s7 + $0x10] sm:$0xff] %vm2254, %v2317
    %2330 = vst.msk [vmem:[%s7 + $0x18] sm:$0xff] %vm2254, %v2326
    // Predicated region
    $region22: #{tpu_custom_call.1} parent=1 // pred_check
      _
    $region23: #{tpu_custom_call.1} parent=1 // pred_check_branch
      %2332 = sbr.rel (0) target = $region25
    $region24: #{tpu_custom_call.1} parent=1 // pred_region
      %s2334 = ssub.s32 4096, 4096
      %2335 = vsyncadd [#allocation3], %s2334
      %s2336 = sshll.u32 [#allocation2], 4
      %s2337 = int_to_ptr.vmem [resolvable:$true] %s2336
      %2342 = dma.vmem_to_hbm [thread:$0]  %s2337, 4096, %s5, [#allocation3], 1024, 1024, 64
    $region25: #{tpu_custom_call.1} parent=1 // pred_fallthru
      _
    // Predicated region
    $region26: #{tpu_custom_call.1} parent=1 // pred_check
      _
    $region27: #{tpu_custom_call.1} parent=1 // pred_check_branch
      %2344 = sbr.rel (0) target = $region29
    $region28: #{tpu_custom_call.1} parent=1 // pred_region
      _
    $region29: #{tpu_custom_call.1} parent=1 // pred_fallthru
      _
    // Predicated region
    $region30: #{tpu_custom_call.1} parent=1 // pred_check
      _
    $region31: #{tpu_custom_call.1} parent=1 // pred_check_branch
      %2346 = sbr.rel (0) target = $region33
    $region32: #{tpu_custom_call.1} parent=1 // pred_region
      _
    $region33: #{tpu_custom_call.1} parent=1 // pred_fallthru
      _
    // Predicated region
    $region34: #{tpu_custom_call.1} parent=1 // pred_check
      _
    $region35: #{tpu_custom_call.1} parent=1 // pred_check_branch
      %2348 = sbr.rel (0) target = $region37
    $region36: #{tpu_custom_call.1} parent=1 // pred_region
      %2349 = dma.done [#allocation3], 4096
    $region37: #{tpu_custom_call.1} parent=1 // pred_fallthru
      _
    // Predicated region
    $region38: #{tpu_custom_call.1} parent=1 // pred_check
      _
    $region39: #{tpu_custom_call.1} parent=1 // pred_check_branch
      %2351 = sbr.rel (0) target = $region41
    $region40: #{tpu_custom_call.1} parent=1 // pred_region
      _
    $region41: #{tpu_custom_call.1} parent=1 // pred_fallthru
      _
    // Predicated region
    $region42: #{tpu_custom_call.1} parent=1 // pred_check
      _
    $region43: #{tpu_custom_call.1} parent=1 // pred_check_branch
      %2353 = sbr.rel (0) target = $region45
    $region44: #{tpu_custom_call.1} parent=1 // pred_region
      _
    $region45: #{tpu_custom_call.1} parent=1 // pred_fallthru
      _
    %2354 = vsyncpa [#allocation3], 1

</llo_original>
